<compile_context>
chip_gen: v6e
topology: v6e:2x2x1
jax: 0.10.0
libtpu: 0.0.40
codegen_flags: <defaults>
</compile_context>

<pallas_src>
import math

import jax
import jax.numpy as jnp
from jax.experimental import pallas as pl
from jax.experimental.pallas import tpu as pltpu

_INV_SQRT2 = 1.0 / math.sqrt(2.0)


def _geglu_kernel(x_ref, w11_ref, b11_ref, w12_ref, b12_ref, w2_ref, b2_ref,
                  o_ref):
    # x tile arrives in its native dtype; cast to bf16 only to feed the MXU.
    x = x_ref[...].astype(jnp.bfloat16)                        # (TM, C)
    # fc11 / fc12 : (TM, C) @ (C, Hid) -> (TM, Hid), f32 accumulation.
    h1 = jnp.dot(x, w11_ref[...], preferred_element_type=jnp.float32)
    h1 = h1 + b11_ref[...]
    h2 = jnp.dot(x, w12_ref[...], preferred_element_type=jnp.float32)
    h2 = h2 + b12_ref[...]
    # Exact (erf-based) GELU in f32, matching PyTorch's default nn.GELU().
    g = 0.5 * h1 * (1.0 + jax.lax.erf(h1 * _INV_SQRT2))
    h = (g * h2).astype(jnp.bfloat16)                          # GEGLU gate
    # fc2 : (TM, Hid) @ (Hid, Cout) -> (TM, Cout)
    out = jnp.dot(h, w2_ref[...], preferred_element_type=jnp.float32)
    out = out + b2_ref[...]
    o_ref[...] = out.astype(o_ref.dtype)


def _vmem_bytes(tm, c_in, hidden, c_out, x_itemsize, out_itemsize):
    """Rough VMEM footprint (double-buffered x/out tiles + resident weights)."""
    tiles = 2 * tm * c_in * x_itemsize + 2 * tm * c_out * out_itemsize
    weights = 2 * ((2 * c_in * hidden + hidden * c_out) * 2       # bf16
                   + (2 * hidden + c_out) * 4)                    # f32 biases
    interm = 3 * tm * hidden * 4 + tm * hidden * 2 + tm * c_in * 2
    return tiles + weights + interm


def mlp_geglu_pallas(x, params, *, tile_rows=512):
    """x: (B, D, H, W, C). params: transposed weights (in, out) + biases."""
    B, D, H, W, C = x.shape
    w11, b11 = params["w11"], params["b11"]   # (C, Hid), (1, Hid)
    w12, b12 = params["w12"], params["b12"]   # (C, Hid), (1, Hid)
    w2, b2 = params["w2"], params["b2"]       # (Hid, Cout), (1, Cout)
    hidden = w11.shape[1]
    c_out = w2.shape[1]

    n = B * D * H * W
    x2 = x.reshape(n, C)

    # bf16 weights for the MXU (halves weight DMA bytes / VMEM residency);
    # biases stay f32 and accumulation is f32 inside the kernel.
    w11b = w11.astype(jnp.bfloat16)
    w12b = w12.astype(jnp.bfloat16)
    w2b = w2.astype(jnp.bfloat16)
    b11f = b11.astype(jnp.float32)
    b12f = b12.astype(jnp.float32)
    b2f = b2.astype(jnp.float32)

    x_isz = x2.dtype.itemsize
    o_isz = jnp.dtype(x.dtype).itemsize

    # Row tile: large multiple of 128 for MXU occupancy; shrink only if the
    # VMEM estimate exceeds ~40 MiB.  Small N becomes a single full-extent
    # block (legal even if not a multiple of 8).
    if n <= tile_rows:
        tm = n
    else:
        tm = max(128, (tile_rows // 128) * 128)
        while tm > 128 and _vmem_bytes(tm, C, hidden, c_out,
                                       x_isz, o_isz) > (40 << 20):
            tm //= 2

    vmem_limit = int(min(max(2 * _vmem_bytes(tm, C, hidden, c_out,
                                             x_isz, o_isz),
                             32 << 20),
                         60 << 20))

    cost = pl.CostEstimate(
        flops=2 * n * (2 * C * hidden + hidden * c_out),
        transcendentals=n * hidden,
        bytes_accessed=(n * C * x_isz + n * c_out * o_isz
                        + (2 * C * hidden + hidden * c_out) * 2
                        + (2 * hidden + c_out) * 4),
    )

    # Weight/bias BlockSpecs: constant block index across the grid -> Pallas
    # DMAs them once and keeps them VMEM-resident for every row tile.
    def w_spec(shape):
        return pl.BlockSpec(shape, lambda i: (0, 0))

    call = pl.pallas_call(
        _geglu_kernel,
        out_shape=jax.ShapeDtypeStruct((n, c_out), x.dtype),
        grid_spec=pltpu.PrefetchScalarGridSpec(
            num_scalar_prefetch=0,
            grid=(pl.cdiv(n, tm),),
            in_specs=[
                pl.BlockSpec((tm, C), lambda i: (i, 0)),       # x rows
                w_spec((C, hidden)),                           # w11 (bf16)
                w_spec((1, hidden)),                           # b11 (f32)
                w_spec((C, hidden)),                           # w12 (bf16)
                w_spec((1, hidden)),                           # b12 (f32)
                w_spec((hidden, c_out)),                       # w2  (bf16)
                w_spec((1, c_out)),                            # b2  (f32)
            ],
            out_specs=pl.BlockSpec((tm, c_out), lambda i: (i, 0)),
        ),
        compiler_params=pltpu.CompilerParams(
            dimension_semantics=("parallel",),
            vmem_limit_bytes=vmem_limit),
        cost_estimate=cost,
    )

    out = call(x2, w11b, b11f, w12b, b12f, w2b, b2f)
    return out.reshape(B, D, H, W, c_out)


def init_params(key, in_features, hidden_features, out_features,
                dtype=jnp.float32):
    """Deterministic init mirroring nn.Linear shapes; stored transposed."""
    ks = jax.random.split(key, 6)

    def lin(kw, kb, fan_in, fan_out):
        bound = 1.0 / math.sqrt(fan_in)
        w = jax.random.uniform(kw, (fan_in, fan_out), dtype, -bound, bound)
        b = jax.random.uniform(kb, (1, fan_out), dtype, -bound, bound)
        return w, b

    w11, b11 = lin(ks[0], ks[1], in_features, hidden_features)
    w12, b12 = lin(ks[2], ks[3], in_features, hidden_features)
    w2, b2 = lin(ks[4], ks[5], hidden_features, out_features)
    return {"w11": w11, "b11": b11, "w12": w12, "b12": b12,
            "w2": w2, "b2": b2}


def mlp_geglu_ref_f32(x2, params):
    """Pure-f32 JAX reference (module semantics)."""
    h1 = x2 @ params["w11"] + params["b11"][0]
    h2 = x2 @ params["w12"] + params["b12"][0]
    g = 0.5 * h1 * (1.0 + jax.lax.erf(h1 * _INV_SQRT2))
    return (g * h2) @ params["w2"] + params["b2"][0]


def mlp_geglu_ref_bf16(x2, params):
    """Reference mirroring kernel precision (bf16 MXU operands, f32 acc)."""
    xb = x2.astype(jnp.bfloat16)
    w11 = params["w11"].astype(jnp.bfloat16)
    w12 = params["w12"].astype(jnp.bfloat16)
    w2 = params["w2"].astype(jnp.bfloat16)
    h1 = jnp.dot(xb, w11, preferred_element_type=jnp.float32) + params["b11"][0]
    h2 = jnp.dot(xb, w12, preferred_element_type=jnp.float32) + params["b12"][0]
    g = 0.5 * h1 * (1.0 + jax.lax.erf(h1 * _INV_SQRT2))
    h = (g * h2).astype(jnp.bfloat16)
    return jnp.dot(h, w2, preferred_element_type=jnp.float32) + params["b2"][0]


if __name__ == "__main__":
    key = jax.random.PRNGKey(0)
    k_x, k_p = jax.random.split(key)

    # Small shapes consistent with the module's (B, D, H, W, C) input.
    # n = B*D*H*W = 384 rows: with tile_rows=256 this exercises a multi-step
    # grid including a ragged (masked) last block.
    B, D, H, W, C = 2, 3, 8, 8, 32
    hidden = 64
    out_features = C

    x = jax.random.normal(k_x, (B, D, H, W, C), dtype=jnp.float32)
    params = init_params(k_p, C, hidden, out_features)

    y = mlp_geglu_pallas(x, params, tile_rows=256)
    y = jax.block_until_ready(y)
    assert y.shape == (B, D, H, W, out_features)

    x2 = x.reshape(-1, C)
    y_bf16 = mlp_geglu_ref_bf16(x2, params).reshape(y.shape)
    y_f32 = mlp_geglu_ref_f32(x2, params).reshape(y.shape)

    assert jnp.allclose(y, y_bf16, atol=2e-3, rtol=2e-3), \
        "mismatch vs precision-matched reference"
    assert jnp.allclose(y, y_f32, atol=1e-1, rtol=1e-1), \
        "mismatch vs f32 reference"

    print("KERNEL_OK")
</pallas_src>

<mosaic_0001>
module attributes {stable_mosaic.version = 11 : i64} {
  func.func @_geglu_kernel(%arg0: i32, %arg1: memref<256x32xf32, #tpu.memory_space<vmem>>, %arg2: memref<32x64xbf16, #tpu.memory_space<vmem>>, %arg3: memref<1x64xf32, #tpu.memory_space<vmem>>, %arg4: memref<32x64xbf16, #tpu.memory_space<vmem>>, %arg5: memref<1x64xf32, #tpu.memory_space<vmem>>, %arg6: memref<64x32xbf16, #tpu.memory_space<vmem>>, %arg7: memref<1x32xf32, #tpu.memory_space<vmem>>, %arg8: memref<256x32xf32, #tpu.memory_space<vmem>>) attributes {dimension_semantics = [#tpu.dimension_semantics<parallel>], iteration_bounds = array<i64: 2>, scalar_prefetch = 0 : i64, scratch_operands = 0 : i64, tpu.core_type = #tpu.core_type<tc>, window_params = [{transform_indices = @transform_0, window_bounds = array<i64: 256, 32>}, {pipeline_mode = #tpu.pipeline_mode<synchronous>, transform_indices = @transform_1, window_bounds = array<i64: 32, 64>}, {pipeline_mode = #tpu.pipeline_mode<synchronous>, transform_indices = @transform_2, window_bounds = array<i64: 1, 64>}, {pipeline_mode = #tpu.pipeline_mode<synchronous>, transform_indices = @transform_3, window_bounds = array<i64: 32, 64>}, {pipeline_mode = #tpu.pipeline_mode<synchronous>, transform_indices = @transform_4, window_bounds = array<i64: 1, 64>}, {pipeline_mode = #tpu.pipeline_mode<synchronous>, transform_indices = @transform_5, window_bounds = array<i64: 64, 32>}, {pipeline_mode = #tpu.pipeline_mode<synchronous>, transform_indices = @transform_6, window_bounds = array<i64: 1, 32>}, {transform_indices = @transform_7, window_bounds = array<i64: 256, 32>}]} {
    %c0 = arith.constant 0 : index
    %c0_0 = arith.constant 0 : index
    %0 = vector.load %arg1[%c0, %c0_0] : memref<256x32xf32, #tpu.memory_space<vmem>>, vector<256x32xf32>
    %1 = arith.truncf %0 : vector<256x32xf32> to vector<256x32xbf16>
    %c0_1 = arith.constant 0 : index
    %c0_2 = arith.constant 0 : index
    %2 = vector.load %arg2[%c0_1, %c0_2] : memref<32x64xbf16, #tpu.memory_space<vmem>>, vector<32x64xbf16>
    %cst = arith.constant dense<0.000000e+00> : vector<256x64xf32>
    %3 = tpu.matmul %1, %2, %cst {dimension_numbers = #tpu.dot_dimension_numbers<[1], [0], [0], [1], [0, 0, 1, 1], [], []>} : vector<256x32xbf16>, vector<32x64xbf16>, vector<256x64xf32> -> vector<256x64xf32>
    %c0_3 = arith.constant 0 : index
    %c0_4 = arith.constant 0 : index
    %4 = vector.load %arg3[%c0_3, %c0_4] : memref<1x64xf32, #tpu.memory_space<vmem>>, vector<1x64xf32>
    %5 = vector.broadcast %4 : vector<1x64xf32> to vector<256x64xf32>
    %6 = arith.addf %3, %5 : vector<256x64xf32>
    %c0_5 = arith.constant 0 : index
    %c0_6 = arith.constant 0 : index
    %7 = vector.load %arg4[%c0_5, %c0_6] : memref<32x64xbf16, #tpu.memory_space<vmem>>, vector<32x64xbf16>
    %cst_7 = arith.constant dense<0.000000e+00> : vector<256x64xf32>
    %8 = tpu.matmul %1, %7, %cst_7 {dimension_numbers = #tpu.dot_dimension_numbers<[1], [0], [0], [1], [0, 0, 1, 1], [], []>} : vector<256x32xbf16>, vector<32x64xbf16>, vector<256x64xf32> -> vector<256x64xf32>
    %c0_8 = arith.constant 0 : index
    %c0_9 = arith.constant 0 : index
    %9 = vector.load %arg5[%c0_8, %c0_9] : memref<1x64xf32, #tpu.memory_space<vmem>>, vector<1x64xf32>
    %10 = vector.broadcast %9 : vector<1x64xf32> to vector<256x64xf32>
    %11 = arith.addf %8, %10 : vector<256x64xf32>
    %cst_10 = arith.constant 5.000000e-01 : f32
    %12 = vector.broadcast %cst_10 : f32 to vector<256x64xf32>
    %13 = arith.mulf %12, %6 : vector<256x64xf32>
    %cst_11 = arith.constant 0.707106769 : f32
    %14 = vector.broadcast %cst_11 : f32 to vector<256x64xf32>
    %15 = arith.mulf %6, %14 : vector<256x64xf32>
    %16 = math.erf %15 : vector<256x64xf32>
    %cst_12 = arith.constant 1.000000e+00 : f32
    %17 = vector.broadcast %cst_12 : f32 to vector<256x64xf32>
    %18 = arith.addf %17, %16 : vector<256x64xf32>
    %19 = arith.mulf %13, %18 : vector<256x64xf32>
    %20 = arith.mulf %19, %11 : vector<256x64xf32>
    %21 = arith.truncf %20 : vector<256x64xf32> to vector<256x64xbf16>
    %c0_13 = arith.constant 0 : index
    %c0_14 = arith.constant 0 : index
    %22 = vector.load %arg6[%c0_13, %c0_14] : memref<64x32xbf16, #tpu.memory_space<vmem>>, vector<64x32xbf16>
    %cst_15 = arith.constant dense<0.000000e+00> : vector<256x32xf32>
    %23 = tpu.matmul %21, %22, %cst_15 {dimension_numbers = #tpu.dot_dimension_numbers<[1], [0], [0], [1], [0, 0, 1, 1], [], []>} : vector<256x64xbf16>, vector<64x32xbf16>, vector<256x32xf32> -> vector<256x32xf32>
    %c0_16 = arith.constant 0 : index
    %c0_17 = arith.constant 0 : index
    %24 = vector.load %arg7[%c0_16, %c0_17] : memref<1x32xf32, #tpu.memory_space<vmem>>, vector<1x32xf32>
    %25 = vector.broadcast %24 : vector<1x32xf32> to vector<256x32xf32>
    %26 = arith.addf %23, %25 : vector<256x32xf32>
    %c0_18 = arith.constant 0 : index
    %c0_19 = arith.constant 0 : index
    %27 = vector.load %arg8[%c0_18, %c0_19] : memref<256x32xf32, #tpu.memory_space<vmem>>, vector<256x32xf32>
    tpu.vector_store %arg8[%c0_18, %c0_19], %26 {strides = array<i32>} : memref<256x32xf32, #tpu.memory_space<vmem>>, vector<256x32xf32>,
    return
  }
  func.func @transform_0(%arg0: i32) -> (i32, i32) {
    %c0_i32 = arith.constant 0 : i32
    %c0_i32_0 = arith.constant 0 : i32
    return %arg0, %c0_i32 : i32, i32
  }
  func.func @transform_1(%arg0: i32) -> (i32, i32) {
    %c0_i32 = arith.constant 0 : i32
    %c0_i32_0 = arith.constant 0 : i32
    %c0_i32_1 = arith.constant 0 : i32
    return %c0_i32, %c0_i32_0 : i32, i32
  }
  func.func @transform_2(%arg0: i32) -> (i32, i32) {
    %c0_i32 = arith.constant 0 : i32
    %c0_i32_0 = arith.constant 0 : i32
    %c0_i32_1 = arith.constant 0 : i32
    return %c0_i32, %c0_i32_0 : i32, i32
  }
  func.func @transform_3(%arg0: i32) -> (i32, i32) {
    %c0_i32 = arith.constant 0 : i32
    %c0_i32_0 = arith.constant 0 : i32
    %c0_i32_1 = arith.constant 0 : i32
    return %c0_i32, %c0_i32_0 : i32, i32
  }
  func.func @transform_4(%arg0: i32) -> (i32, i32) {
    %c0_i32 = arith.constant 0 : i32
    %c0_i32_0 = arith.constant 0 : i32
    %c0_i32_1 = arith.constant 0 : i32
    return %c0_i32, %c0_i32_0 : i32, i32
  }
  func.func @transform_5(%arg0: i32) -> (i32, i32) {
    %c0_i32 = arith.constant 0 : i32
    %c0_i32_0 = arith.constant 0 : i32
    %c0_i32_1 = arith.constant 0 : i32
    return %c0_i32, %c0_i32_0 : i32, i32
  }
  func.func @transform_6(%arg0: i32) -> (i32, i32) {
    %c0_i32 = arith.constant 0 : i32
    %c0_i32_0 = arith.constant 0 : i32
    %c0_i32_1 = arith.constant 0 : i32
    return %c0_i32, %c0_i32_0 : i32, i32
  }
  func.func @transform_7(%arg0: i32) -> (i32, i32) {
    %c0_i32 = arith.constant 0 : i32
    %c0_i32_0 = arith.constant 0 : i32
    return %arg0, %c0_i32 : i32, i32
  }
}

</mosaic_0001>

<llo_original>
// kernel: tpu_custom_call.1
$region0: #{tpu_custom_call.1}
  #allocation0 [shape = 'u32[]', space=smem, size = 0x4, offset = 0x4, fixed_abs, tag = 'smem constant byte address 0x4 - core index']
  #allocation1 [shape = 'u32[144,128]{1,0:T(1,128)}', space=vmem, size = 0x12000, scoped, tag = 'internal scratch']
  %s0 = inlined_call_operand.vmem [shape: f32[384,32], index: 0, kind: input, shape index: {}]
  %s1 = inlined_call_operand.vmem [shape: bf16[32,64], index: 1, kind: input, shape index: {}]
  %s2 = inlined_call_operand.vmem [shape: f32[1,64], index: 2, kind: input, shape index: {}]
  %s3 = inlined_call_operand.vmem [shape: bf16[32,64], index: 3, kind: input, shape index: {}]
  %s4 = inlined_call_operand.vmem [shape: f32[1,64], index: 4, kind: input, shape index: {}]
  %s5 = inlined_call_operand.vmem [shape: bf16[64,32], index: 5, kind: input, shape index: {}]
  %s6 = inlined_call_operand.vmem [shape: f32[1,32], index: 6, kind: input, shape index: {}]
  %s7 = inlined_call_operand.vmem [shape: f32[384,32], index: 7, kind: output, shape index: {}]
  %s8 = sld [smem:[#allocation0]]
  $region109: #{tpu_custom_call.1} parent=0
    _
  %s10 = ssub.s32 1, %s8
  %s11 = scalar_select 0, %s10, %s8
  $region1: #{tpu_custom_call.1} parent=0
    #allocation2 [shape = 'u8[262144]{0}', space=vmem, size = 0x40000, scoped, tag = 'output window, operand 0']
    loop: start=0, step=1, limit=4
    $region2: #{tpu_custom_call.1} parent=1 // loop_pre_header
      _
    $region3: #{tpu_custom_call.1} parent=1 // loop_header
      %s13 = sphi 0, %s17
      %p14 = scmp.ge.s32.totalorder %s13, 4
      %s23 = sphi 0, %s25
      %s26 = sphi 0, %s23
      %s27 = sphi 0, %s26
      %s43 = sphi 0, %s27
      %s47 = sphi 0, %s47
      %s49 = sphi 0, %s47
      %s50 = sphi 0, %s49
      %s64 = sphi 0, %s50
      %s68 = sphi 0, %s68
      %s70 = sphi 0, %s68
      %s71 = sphi 0, %s70
      %s85 = sphi 0, %s71
      %s89 = sphi 0, %s89
      %s91 = sphi 0, %s89
      %s92 = sphi 0, %s91
      %s106 = sphi 0, %s92
      %s110 = sphi 0, %s110
      %s112 = sphi 0, %s110
      %s113 = sphi 0, %s112
      %s127 = sphi 0, %s113
      %s131 = sphi 0, %s131
      %s133 = sphi 0, %s131
      %s134 = sphi 0, %s133
      %s148 = sphi 0, %s134
      %s152 = sphi 0, %s152
      %s154 = sphi 0, %s152
      %s155 = sphi 0, %s154
      %s169 = sphi 0, %s155
      %s175 = sphi 0, %s177
      %s178 = sphi 0, %s175
      %s179 = sphi 0, %s178
      %s195 = sphi 0, %s179
    $region4: #{tpu_custom_call.1} parent=1 // loop_header_branch
      %16 = sbr.rel (%p14) target = $region8
    $region5: #{tpu_custom_call.1} parent=1 // loop_body
      %s18 = ssub.s32 %s13, 1
      %s19 = ssub.s32 %s13, 2
      %s20 = sadd.s32 %s13, 1
      %s21 = ssub.s32 %s13, %s20
      %p22 = scmp.eq.s32.totalorder %s21, 0
      %s24 = sadd.s32 %s23, 1
      %s25 = scalar_select %p22, %s23, %s24
      %p28 = pneg %p22
      %p29 = scmp.eq.s32.totalorder %s13, 1
      %p30 = por %p28, %p29
      %p31 = scmp.ne.s32.totalorder %s23, %s26
      %p32 = scmp.eq.s32.totalorder %s13, 0
      %p33 = por %p31, %p32
      %p34 = scmp.ne.s32.totalorder %s23, %s26
      %p35 = scmp.eq.s32.totalorder %s18, 1
      %p36 = por %p34, %p35
      %p37 = scmp.ne.s32.totalorder %s26, %s27
      %p38 = scmp.eq.s32.totalorder %s18, 0
      %p39 = por %p37, %p38
      %p40 = scmp.ne.s32.totalorder %s26, %s27
      %p41 = scmp.eq.s32.totalorder %s19, 1
      %p42 = por %p40, %p41
      %p44 = scmp.ne.s32.totalorder %s27, %s43
      %p45 = scmp.eq.s32.totalorder %s19, 0
      %p46 = por %p44, %p45
      %s48 = sadd.s32 %s47, 1
      %p51 = scmp.eq.s32.totalorder %s13, 1
      %p52 = scmp.ne.s32.totalorder %s47, %s49
      %p53 = scmp.eq.s32.totalorder %s13, 0
      %p54 = por %p52, %p53
      %p55 = scmp.ne.s32.totalorder %s47, %s49
      %p56 = scmp.eq.s32.totalorder %s18, 1
      %p57 = por %p55, %p56
      %p58 = scmp.ne.s32.totalorder %s49, %s50
      %p59 = scmp.eq.s32.totalorder %s18, 0
      %p60 = por %p58, %p59
      %p61 = scmp.ne.s32.totalorder %s49, %s50
      %p62 = scmp.eq.s32.totalorder %s19, 1
      %p63 = por %p61, %p62
      %p65 = scmp.ne.s32.totalorder %s50, %s64
      %p66 = scmp.eq.s32.totalorder %s19, 0
      %p67 = por %p65, %p66
      %s69 = sadd.s32 %s68, 1
      %p72 = scmp.eq.s32.totalorder %s13, 1
      %p73 = scmp.ne.s32.totalorder %s68, %s70
      %p74 = scmp.eq.s32.totalorder %s13, 0
      %p75 = por %p73, %p74
      %p76 = scmp.ne.s32.totalorder %s68, %s70
      %p77 = scmp.eq.s32.totalorder %s18, 1
      %p78 = por %p76, %p77
      %p79 = scmp.ne.s32.totalorder %s70, %s71
      %p80 = scmp.eq.s32.totalorder %s18, 0
      %p81 = por %p79, %p80
      %p82 = scmp.ne.s32.totalorder %s70, %s71
      %p83 = scmp.eq.s32.totalorder %s19, 1
      %p84 = por %p82, %p83
      %p86 = scmp.ne.s32.totalorder %s71, %s85
      %p87 = scmp.eq.s32.totalorder %s19, 0
      %p88 = por %p86, %p87
      %s90 = sadd.s32 %s89, 1
      %p93 = scmp.eq.s32.totalorder %s13, 1
      %p94 = scmp.ne.s32.totalorder %s89, %s91
      %p95 = scmp.eq.s32.totalorder %s13, 0
      %p96 = por %p94, %p95
      %p97 = scmp.ne.s32.totalorder %s89, %s91
      %p98 = scmp.eq.s32.totalorder %s18, 1
      %p99 = por %p97, %p98
      %p100 = scmp.ne.s32.totalorder %s91, %s92
      %p101 = scmp.eq.s32.totalorder %s18, 0
      %p102 = por %p100, %p101
      %p103 = scmp.ne.s32.totalorder %s91, %s92
      %p104 = scmp.eq.s32.totalorder %s19, 1
      %p105 = por %p103, %p104
      %p107 = scmp.ne.s32.totalorder %s92, %s106
      %p108 = scmp.eq.s32.totalorder %s19, 0
      %p109 = por %p107, %p108
      %s111 = sadd.s32 %s110, 1
      %p114 = scmp.eq.s32.totalorder %s13, 1
      %p115 = scmp.ne.s32.totalorder %s110, %s112
      %p116 = scmp.eq.s32.totalorder %s13, 0
      %p117 = por %p115, %p116
      %p118 = scmp.ne.s32.totalorder %s110, %s112
      %p119 = scmp.eq.s32.totalorder %s18, 1
      %p120 = por %p118, %p119
      %p121 = scmp.ne.s32.totalorder %s112, %s113
      %p122 = scmp.eq.s32.totalorder %s18, 0
      %p123 = por %p121, %p122
      %p124 = scmp.ne.s32.totalorder %s112, %s113
      %p125 = scmp.eq.s32.totalorder %s19, 1
      %p126 = por %p124, %p125
      %p128 = scmp.ne.s32.totalorder %s113, %s127
      %p129 = scmp.eq.s32.totalorder %s19, 0
      %p130 = por %p128, %p129
      %s132 = sadd.s32 %s131, 1
      %p135 = scmp.eq.s32.totalorder %s13, 1
      %p136 = scmp.ne.s32.totalorder %s131, %s133
      %p137 = scmp.eq.s32.totalorder %s13, 0
      %p138 = por %p136, %p137
      %p139 = scmp.ne.s32.totalorder %s131, %s133
      %p140 = scmp.eq.s32.totalorder %s18, 1
      %p141 = por %p139, %p140
      %p142 = scmp.ne.s32.totalorder %s133, %s134
      %p143 = scmp.eq.s32.totalorder %s18, 0
      %p144 = por %p142, %p143
      %p145 = scmp.ne.s32.totalorder %s133, %s134
      %p146 = scmp.eq.s32.totalorder %s19, 1
      %p147 = por %p145, %p146
      %p149 = scmp.ne.s32.totalorder %s134, %s148
      %p150 = scmp.eq.s32.totalorder %s19, 0
      %p151 = por %p149, %p150
      %s153 = sadd.s32 %s152, 1
      %p156 = scmp.eq.s32.totalorder %s13, 1
      %p157 = scmp.ne.s32.totalorder %s152, %s154
      %p158 = scmp.eq.s32.totalorder %s13, 0
      %p159 = por %p157, %p158
      %p160 = scmp.ne.s32.totalorder %s152, %s154
      %p161 = scmp.eq.s32.totalorder %s18, 1
      %p162 = por %p160, %p161
      %p163 = scmp.ne.s32.totalorder %s154, %s155
      %p164 = scmp.eq.s32.totalorder %s18, 0
      %p165 = por %p163, %p164
      %p166 = scmp.ne.s32.totalorder %s154, %s155
      %p167 = scmp.eq.s32.totalorder %s19, 1
      %p168 = por %p166, %p167
      %p170 = scmp.ne.s32.totalorder %s155, %s169
      %p171 = scmp.eq.s32.totalorder %s19, 0
      %p172 = por %p170, %p171
      %s173 = ssub.s32 %s13, %s20
      %p174 = scmp.eq.s32.totalorder %s173, 0
      %s176 = sadd.s32 %s175, 1
      %s177 = scalar_select %p174, %s175, %s176
      %p180 = pneg %p174
      %p181 = scmp.eq.s32.totalorder %s13, 1
      %p182 = por %p180, %p181
      %p183 = scmp.ne.s32.totalorder %s175, %s178
      %p184 = scmp.eq.s32.totalorder %s13, 0
      %p185 = por %p183, %p184
      %p186 = scmp.ne.s32.totalorder %s175, %s178
      %p187 = scmp.eq.s32.totalorder %s18, 1
      %p188 = por %p186, %p187
      %p189 = scmp.ne.s32.totalorder %s178, %s179
      %p190 = scmp.eq.s32.totalorder %s18, 0
      %p191 = por %p189, %p190
      %p192 = scmp.ne.s32.totalorder %s178, %s179
      %p193 = scmp.eq.s32.totalorder %s19, 1
      %p194 = por %p192, %p193
      %p196 = scmp.ne.s32.totalorder %s179, %s195
      %p197 = scmp.eq.s32.totalorder %s19, 0
      %p198 = por %p196, %p197
      %p199 = scmp.le.s32.totalorder 1, %s13
      %p200 = scmp.lt.s32.totalorder %s13, 3
      %p201 = pnand %p199, %p200
      %p202 = pneg %p201
      // Predicated region
      $region9: #{tpu_custom_call.1} parent=5 // pred_check
        _
      $region10: #{tpu_custom_call.1} parent=5 // pred_check_branch
        %204 = sbr.rel (%p201) target = $region12
      $region11: #{tpu_custom_call.1} parent=5 // pred_region
        %s205 = ssub.s32 %s13, 1
        // Predicated region
        $region13: #{tpu_custom_call.1} parent=11 // pred_check
          %p206 = pneg %p60
        $region14: #{tpu_custom_call.1} parent=11 // pred_check_branch
          %208 = sbr.rel (%p206) target = $region16
        $region15: #{tpu_custom_call.1} parent=11 // pred_region
          _
        $region16: #{tpu_custom_call.1} parent=11 // pred_fallthru
          _
        // Predicated region
        $region17: #{tpu_custom_call.1} parent=11 // pred_check
          %p209 = pneg %p81
        $region18: #{tpu_custom_call.1} parent=11 // pred_check_branch
          %211 = sbr.rel (%p209) target = $region20
        $region19: #{tpu_custom_call.1} parent=11 // pred_region
          _
        $region20: #{tpu_custom_call.1} parent=11 // pred_fallthru
          _
        // Predicated region
        $region21: #{tpu_custom_call.1} parent=11 // pred_check
          %p212 = pneg %p102
        $region22: #{tpu_custom_call.1} parent=11 // pred_check_branch
          %214 = sbr.rel (%p212) target = $region24
        $region23: #{tpu_custom_call.1} parent=11 // pred_region
          _
        $region24: #{tpu_custom_call.1} parent=11 // pred_fallthru
          _
        // Predicated region
        $region25: #{tpu_custom_call.1} parent=11 // pred_check
          %p215 = pneg %p123
        $region26: #{tpu_custom_call.1} parent=11 // pred_check_branch
          %217 = sbr.rel (%p215) target = $region28
        $region27: #{tpu_custom_call.1} parent=11 // pred_region
          _
        $region28: #{tpu_custom_call.1} parent=11 // pred_fallthru
          _
        // Predicated region
        $region29: #{tpu_custom_call.1} parent=11 // pred_check
          %p218 = pneg %p144
        $region30: #{tpu_custom_call.1} parent=11 // pred_check_branch
          %220 = sbr.rel (%p218) target = $region32
        $region31: #{tpu_custom_call.1} parent=11 // pred_region
          _
        $region32: #{tpu_custom_call.1} parent=11 // pred_fallthru
          _
        // Predicated region
        $region33: #{tpu_custom_call.1} parent=11 // pred_check
          %p221 = pneg %p165
        $region34: #{tpu_custom_call.1} parent=11 // pred_check_branch
          %223 = sbr.rel (%p221) target = $region36
        $region35: #{tpu_custom_call.1} parent=11 // pred_region
          _
        $region36: #{tpu_custom_call.1} parent=11 // pred_fallthru
          _
      $region12: #{tpu_custom_call.1} parent=5 // pred_fallthru
        _
      %p224 = scmp.lt.s32.totalorder %s13, 2
      // Predicated region
      $region37: #{tpu_custom_call.1} parent=5 // pred_check
        %p225 = pneg %p224
      $region38: #{tpu_custom_call.1} parent=5 // pred_check_branch
        %227 = sbr.rel (%p225) target = $region40
      $region39: #{tpu_custom_call.1} parent=5 // pred_region
        // Predicated region
        $region41: #{tpu_custom_call.1} parent=39 // pred_check
          %p228 = pneg %p33
        $region42: #{tpu_custom_call.1} parent=39 // pred_check_branch
          %230 = sbr.rel (%p228) target = $region44
        $region43: #{tpu_custom_call.1} parent=39 // pred_region
          %s231 = smul.u32 32, %s13
          %s232 = ssub.s32 48, %s231
          %p233 = scmp.lt.s32.totalorder %s232, 32
          %s234 = scalar_select %p233, %s232, 32
          %s235 = smul.u32 128, %s234
          %p236 = scmp.lt.s32.totalorder %s231, 47
          %s237 = scalar_select %p236, %s231, 47
          %s238 = smul.addr %s237, 8
          %s239 = scalar_lea.vmem %s0, %s238
          %s240 = smul.u32 32, %s13
          %s241 = ssub.s32 48, %s240
          %p242 = scmp.lt.s32.totalorder %s241, 32
          %s243 = scalar_select %p242, %s241, 32
          %s244 = smul.u32 128, %s243
        $region44: #{tpu_custom_call.1} parent=39 // pred_fallthru
          _
      $region40: #{tpu_custom_call.1} parent=5 // pred_fallthru
        _
      %p245 = scmp.le.s32.totalorder 1, %s13
      %p246 = scmp.lt.s32.totalorder %s13, 3
      %p247 = pnand %p245, %p246
      %p248 = pneg %p247
      // Predicated region
      $region45: #{tpu_custom_call.1} parent=5 // pred_check
        _
      $region46: #{tpu_custom_call.1} parent=5 // pred_check_branch
        %250 = sbr.rel (%p247) target = $region48
      $region47: #{tpu_custom_call.1} parent=5 // pred_region
        %s251 = ssub.s32 %s13, 1
        %s252 = smul.u32 32, %s18
        %s253 = ssub.s32 48, %s252
        %p254 = scmp.lt.s32.totalorder %s253, 32
        %s255 = scalar_select %p254, %s253, 32
        %s256 = smul.u32 128, %s255
        %p257 = scmp.lt.s32.totalorder %s252, 47
        %s258 = scalar_select %p257, %s252, 47
        %s259 = smul.addr %s258, 8
        %s260 = scalar_lea.vmem %s0, %s259
        %p261 = pneg %p39
        %p262 = pneg %p36
        %p263 = pneg %p60
        %p264 = pneg %p57
        %p265 = pneg %p81
        %p266 = pneg %p78
        %p267 = pneg %p102
        %p268 = pneg %p99
        %p269 = pneg %p123
        %p270 = pneg %p120
        %p271 = pneg %p144
        %p272 = pneg %p141
        %p273 = pneg %p165
        %p274 = pneg %p162
        %p275 = pneg %p191
        %p276 = pneg %p188
        %s277 = sand.u32 %s178, 1
        %s278 = sand.u32 %s178, 1
        %s279 = smul.addr %s278, 256
        %s280 = scalar_lea.vmem [#allocation2], %s279
        %s281 = smul.u32 32, %s18
        %s282 = ssub.s32 48, %s281
        %p283 = scmp.lt.s32.totalorder %s282, 32
        %s284 = scalar_select %p283, %s282, 32
        %s285 = smul.u32 128, %s284
        %p286 = scmp.lt.s32.totalorder %s281, 47
        %s287 = scalar_select %p286, %s281, 47
        %s288 = smul.addr %s287, 8
        %s289 = scalar_lea.vmem %s0, %s288
        %s290 = smul.u32 32, %s18
        %s291 = ssub.s32 48, %s290
        %p292 = scmp.lt.s32.totalorder %s291, 32
        %s293 = scalar_select %p292, %s291, 32
        %s294 = smul.u32 128, %s293
        %s295 = smul.u32 32, %s18
        %s296 = ssub.s32 48, %s295
        %p297 = scmp.lt.s32.totalorder %s296, 32
        %s298 = scalar_select %p297, %s296, 32
        %s299 = smul.u32 128, %s298
        %v301 = vld [vmem:[%s289] sm:$0xff]
        %v302 = vld [vmem:[%s289 + $0x8] sm:$0xff]
        %v303 = vld [vmem:[%s289 + $0x10] sm:$0xff]
        %v304 = vld [vmem:[%s289 + $0x18] sm:$0xff]
        %v305 = vld [vmem:[%s289 + $0x20] sm:$0xff]
        %v306 = vld [vmem:[%s289 + $0x28] sm:$0xff]
        %v307 = vld [vmem:[%s289 + $0x30] sm:$0xff]
        %v308 = vld [vmem:[%s289 + $0x38] sm:$0xff]
        %v309 = vld [vmem:[%s289 + $0x40] sm:$0xff]
        %v310 = vld [vmem:[%s289 + $0x48] sm:$0xff]
        %v311 = vld [vmem:[%s289 + $0x50] sm:$0xff]
        %v312 = vld [vmem:[%s289 + $0x58] sm:$0xff]
        %v313 = vld [vmem:[%s289 + $0x60] sm:$0xff]
        %v314 = vld [vmem:[%s289 + $0x68] sm:$0xff]
        %v315 = vld [vmem:[%s289 + $0x70] sm:$0xff]
        %v316 = vld [vmem:[%s289 + $0x78] sm:$0xff]
        %v317 = vld [vmem:[%s289 + $0x80] sm:$0xff]
        %v318 = vld [vmem:[%s289 + $0x88] sm:$0xff]
        %v319 = vld [vmem:[%s289 + $0x90] sm:$0xff]
        %v320 = vld [vmem:[%s289 + $0x98] sm:$0xff]
        %v321 = vld [vmem:[%s289 + $0xa0] sm:$0xff]
        %v322 = vld [vmem:[%s289 + $0xa8] sm:$0xff]
        %v323 = vld [vmem:[%s289 + $0xb0] sm:$0xff]
        %v324 = vld [vmem:[%s289 + $0xb8] sm:$0xff]
        %v325 = vld [vmem:[%s289 + $0xc0] sm:$0xff]
        %v326 = vld [vmem:[%s289 + $0xc8] sm:$0xff]
        %v327 = vld [vmem:[%s289 + $0xd0] sm:$0xff]
        %v328 = vld [vmem:[%s289 + $0xd8] sm:$0xff]
        %v329 = vld [vmem:[%s289 + $0xe0] sm:$0xff]
        %v330 = vld [vmem:[%s289 + $0xe8] sm:$0xff]
        %v331 = vld [vmem:[%s289 + $0xf0] sm:$0xff]
        %v332 = vld [vmem:[%s289 + $0xf8] sm:$0xff]
        %v333 = vpack.c.bf16 %v302, %v301
        %v334 = vpack.c.bf16 %v304, %v303
        %v335 = vpack.c.bf16 %v306, %v305
        %v336 = vpack.c.bf16 %v308, %v307
        %v337 = vpack.c.bf16 %v310, %v309
        %v338 = vpack.c.bf16 %v312, %v311
        %v339 = vpack.c.bf16 %v314, %v313
        %v340 = vpack.c.bf16 %v316, %v315
        %v341 = vpack.c.bf16 %v318, %v317
        %v342 = vpack.c.bf16 %v320, %v319
        %v343 = vpack.c.bf16 %v322, %v321
        %v344 = vpack.c.bf16 %v324, %v323
        %v345 = vpack.c.bf16 %v326, %v325
        %v346 = vpack.c.bf16 %v328, %v327
        %v347 = vpack.c.bf16 %v330, %v329
        %v348 = vpack.c.bf16 %v332, %v331
        %v349 = vld [vmem:[%s1] sm:$0xf]
        %v350 = vld [vmem:[%s1 + $0x4] sm:$0xf]
        %v351 = vld [vmem:[%s1 + $0x8] sm:$0xf]
        %v352 = vld [vmem:[%s1 + $0xc] sm:$0xf]
        %v353 = vld [vmem:[%s2] sm:$0x1]
        %v355 = vlaneseq
        %v356 = vshrl.u32 %v355, 7
        %v357 = vsub.s32 0, %v356
        %v358 = vrot.slane %v353, %v357
        %v364 = vunpack.c.l.b16 %v349
        %v365 = vunpack.c.l.b16 %v350
        %v366 = vunpack.c.l.b16 %v351
        %v367 = vunpack.c.l.b16 %v352
        %v368 = vpack.c.b16 %v365, %v364
        %v369 = vpack.c.b16 %v367, %v366
        %vm372 = vcmask 261120
        %v374 = vsel %vm372, %v333, 0
        %v377 = vsel %vm372, %v334, 0
        %v380 = vsel %vm372, %v335, 0
        %v383 = vsel %vm372, %v336, 0
        %v386 = vsel %vm372, %v337, 0
        %v389 = vsel %vm372, %v338, 0
        %v392 = vsel %vm372, %v339, 0
        %v395 = vsel %vm372, %v340, 0
        %v398 = vsel %vm372, %v341, 0
        %v401 = vsel %vm372, %v342, 0
        %v404 = vsel %vm372, %v343, 0
        %v407 = vsel %vm372, %v344, 0
        %v410 = vsel %vm372, %v345, 0
        %v413 = vsel %vm372, %v346, 0
        %v416 = vsel %vm372, %v347, 0
        %v419 = vsel %vm372, %v348, 0
        %421 = vmatprep.subr.bf16.mxu0 0
        %422 = vmatpush1.bf16.msra.mxu0 0
        %423 = vmatprep.subr.bf16.mxu0 0
        %424 = vmatpush1.bf16.msra.mxu0 0
        %425 = vmatprep.subr.bf16.mxu0 0
        %426 = vmatpush1.bf16.msra.mxu0 0
        %427 = vmatprep.subr.bf16.mxu0 0
        %428 = vmatpush1.bf16.msra.mxu0 0
        %429 = vmatprep.subr.bf16.mxu0 0
        %430 = vmatpush1.bf16.msra.mxu0 0
        %431 = vmatprep.subr.bf16.mxu0 0
        %432 = vmatpush1.bf16.msra.mxu0 0
        %433 = vmatprep.subr.bf16.mxu0 0
        %434 = vmatpush1.bf16.msra.mxu0 %v369
        %435 = vmatprep.subr.bf16.mxu0 0
        %436 = vmatpush1.bf16.msra.mxu0 %v368
        %437 = vmatprep.subr.bf16.mxu0 0
        %438 = vmatpush2.bf16.msra.mxu0 0
        %439 = vmatprep.subr.bf16.mxu0 0
        %440 = vmatpush2.bf16.msra.mxu0 0
        %441 = vmatprep.subr.bf16.mxu0 0
        %442 = vmatpush2.bf16.msra.mxu0 0
        %443 = vmatprep.subr.bf16.mxu0 0
        %444 = vmatpush2.bf16.msra.mxu0 0
        %445 = vmatprep.subr.bf16.mxu0 0
        %446 = vmatpush2.bf16.msra.mxu0 0
        %447 = vmatprep.subr.bf16.mxu0 0
        %448 = vmatpush2.bf16.msra.mxu0 0
        %449 = vmatprep.subr.bf16.mxu0 0
        %450 = vmatpush2.bf16.msra.mxu0 0
        %451 = vmatprep.subr.bf16.mxu0 0
        %452 = vmatpush2.bf16.msra.mxu0 0
        %453 = vmatprep.mubr.bf16.mxu0 0
        %454 = vmatmul.mubr.bf16.gmra.mxu0 %v374
        %v455 = vpop.f32.mrf.mxu0
        %v456 = vadd.f32 %v358, %v455
        %v457 = vpop.f32.mrf.mxu0
        %v458 = vpop.f32.mrf.mxu0
        %v459 = vadd.f32 %v358, %v458
        %v460 = vpop.f32.mrf.mxu0
        %461 = vmatprep.mubr.bf16.mxu0 0
        %462 = vmatmul.mubr.bf16.gmra.mxu0 %v377
        %v463 = vpop.f32.mrf.mxu0
        %v464 = vadd.f32 %v358, %v463
        %v465 = vpop.f32.mrf.mxu0
        %v466 = vpop.f32.mrf.mxu0
        %v467 = vadd.f32 %v358, %v466
        %v468 = vpop.f32.mrf.mxu0
        %469 = vmatprep.mubr.bf16.mxu0 0
        %470 = vmatmul.mubr.bf16.gmra.mxu0 %v380
        %v471 = vpop.f32.mrf.mxu0
        %v472 = vadd.f32 %v358, %v471
        %v473 = vpop.f32.mrf.mxu0
        %v474 = vpop.f32.mrf.mxu0
        %v475 = vadd.f32 %v358, %v474
        %v476 = vpop.f32.mrf.mxu0
        %477 = vmatprep.mubr.bf16.mxu0 0
        %478 = vmatmul.mubr.bf16.gmra.mxu0 %v383
        %v479 = vpop.f32.mrf.mxu0
        %v480 = vadd.f32 %v358, %v479
        %v481 = vpop.f32.mrf.mxu0
        %v482 = vpop.f32.mrf.mxu0
        %v483 = vadd.f32 %v358, %v482
        %v484 = vpop.f32.mrf.mxu0
        %485 = vmatprep.mubr.bf16.mxu0 0
        %486 = vmatmul.mubr.bf16.gmra.mxu0 %v386
        %v487 = vpop.f32.mrf.mxu0
        %v488 = vadd.f32 %v358, %v487
        %v489 = vpop.f32.mrf.mxu0
        %v490 = vpop.f32.mrf.mxu0
        %v491 = vadd.f32 %v358, %v490
        %v492 = vpop.f32.mrf.mxu0
        %493 = vmatprep.mubr.bf16.mxu0 0
        %494 = vmatmul.mubr.bf16.gmra.mxu0 %v389
        %v495 = vpop.f32.mrf.mxu0
        %v496 = vadd.f32 %v358, %v495
        %v497 = vpop.f32.mrf.mxu0
        %v498 = vpop.f32.mrf.mxu0
        %v499 = vadd.f32 %v358, %v498
        %v500 = vpop.f32.mrf.mxu0
        %501 = vmatprep.mubr.bf16.mxu0 0
        %502 = vmatmul.mubr.bf16.gmra.mxu0 %v392
        %v503 = vpop.f32.mrf.mxu0
        %v504 = vadd.f32 %v358, %v503
        %v505 = vpop.f32.mrf.mxu0
        %v506 = vpop.f32.mrf.mxu0
        %v507 = vadd.f32 %v358, %v506
        %v508 = vpop.f32.mrf.mxu0
        %509 = vmatprep.mubr.bf16.mxu0 0
        %510 = vmatmul.mubr.bf16.gmra.mxu0 %v395
        %v511 = vpop.f32.mrf.mxu0
        %v512 = vadd.f32 %v358, %v511
        %v513 = vpop.f32.mrf.mxu0
        %v514 = vpop.f32.mrf.mxu0
        %v515 = vadd.f32 %v358, %v514
        %v516 = vpop.f32.mrf.mxu0
        %517 = vmatprep.mubr.bf16.mxu0 0
        %518 = vmatmul.mubr.bf16.gmra.mxu0 %v398
        %v519 = vpop.f32.mrf.mxu0
        %v520 = vadd.f32 %v358, %v519
        %v521 = vpop.f32.mrf.mxu0
        %v522 = vpop.f32.mrf.mxu0
        %v523 = vadd.f32 %v358, %v522
        %v524 = vpop.f32.mrf.mxu0
        %525 = vmatprep.mubr.bf16.mxu0 0
        %526 = vmatmul.mubr.bf16.gmra.mxu0 %v401
        %v527 = vpop.f32.mrf.mxu0
        %v528 = vadd.f32 %v358, %v527
        %v529 = vpop.f32.mrf.mxu0
        %v530 = vpop.f32.mrf.mxu0
        %v531 = vadd.f32 %v358, %v530
        %v532 = vpop.f32.mrf.mxu0
        %533 = vmatprep.mubr.bf16.mxu0 0
        %534 = vmatmul.mubr.bf16.gmra.mxu0 %v404
        %v535 = vpop.f32.mrf.mxu0
        %v536 = vadd.f32 %v358, %v535
        %v537 = vpop.f32.mrf.mxu0
        %v538 = vpop.f32.mrf.mxu0
        %v539 = vadd.f32 %v358, %v538
        %v540 = vpop.f32.mrf.mxu0
        %541 = vmatprep.mubr.bf16.mxu0 0
        %542 = vmatmul.mubr.bf16.gmra.mxu0 %v407
        %v543 = vpop.f32.mrf.mxu0
        %v544 = vadd.f32 %v358, %v543
        %v545 = vpop.f32.mrf.mxu0
        %v546 = vpop.f32.mrf.mxu0
        %v547 = vadd.f32 %v358, %v546
        %v548 = vpop.f32.mrf.mxu0
        %549 = vmatprep.mubr.bf16.mxu0 0
        %550 = vmatmul.mubr.bf16.gmra.mxu0 %v410
        %v551 = vpop.f32.mrf.mxu0
        %v552 = vadd.f32 %v358, %v551
        %v553 = vpop.f32.mrf.mxu0
        %v554 = vpop.f32.mrf.mxu0
        %v555 = vadd.f32 %v358, %v554
        %v556 = vpop.f32.mrf.mxu0
        %557 = vmatprep.mubr.bf16.mxu0 0
        %558 = vmatmul.mubr.bf16.gmra.mxu0 %v413
        %v559 = vpop.f32.mrf.mxu0
        %v560 = vadd.f32 %v358, %v559
        %v561 = vpop.f32.mrf.mxu0
        %v562 = vpop.f32.mrf.mxu0
        %v563 = vadd.f32 %v358, %v562
        %v564 = vpop.f32.mrf.mxu0
        %565 = vmatprep.mubr.bf16.mxu0 0
        %566 = vmatmul.mubr.bf16.gmra.mxu0 %v416
        %v567 = vpop.f32.mrf.mxu0
        %v568 = vadd.f32 %v358, %v567
        %v569 = vpop.f32.mrf.mxu0
        %v570 = vpop.f32.mrf.mxu0
        %v571 = vadd.f32 %v358, %v570
        %v572 = vpop.f32.mrf.mxu0
        %573 = vmatprep.mubr.bf16.mxu0 0
        %574 = vmatmul.mubr.bf16.gmra.mxu0 %v419
        %v575 = vpop.f32.mrf.mxu0
        %v576 = vadd.f32 %v358, %v575
        %v577 = vpop.f32.mrf.mxu0
        %v578 = vpop.f32.mrf.mxu0
        %v579 = vadd.f32 %v358, %v578
        %v580 = vpop.f32.mrf.mxu0
        %581 = vdwg.mxu0
        %v582 = vld [vmem:[%s3] sm:$0xf]
        %v583 = vld [vmem:[%s3 + $0x4] sm:$0xf]
        %v584 = vld [vmem:[%s3 + $0x8] sm:$0xf]
        %v585 = vld [vmem:[%s3 + $0xc] sm:$0xf]
        %v586 = vld [vmem:[%s4] sm:$0x1]
        %v588 = vlaneseq
        %v589 = vshrl.u32 %v588, 7
        %v590 = vsub.s32 0, %v589
        %v591 = vrot.slane %v586, %v590
        %v597 = vunpack.c.l.b16 %v582
        %v598 = vunpack.c.l.b16 %v583
        %v599 = vunpack.c.l.b16 %v584
        %v600 = vunpack.c.l.b16 %v585
        %v601 = vpack.c.b16 %v598, %v597
        %v602 = vpack.c.b16 %v600, %v599
        %605 = vmatprep.subr.bf16.mxu0 0
        %606 = vmatpush1.bf16.msra.mxu0 0
        %607 = vmatprep.subr.bf16.mxu0 0
        %608 = vmatpush1.bf16.msra.mxu0 0
        %609 = vmatprep.subr.bf16.mxu0 0
        %610 = vmatpush1.bf16.msra.mxu0 0
        %611 = vmatprep.subr.bf16.mxu0 0
        %612 = vmatpush1.bf16.msra.mxu0 0
        %613 = vmatprep.subr.bf16.mxu0 0
        %614 = vmatpush1.bf16.msra.mxu0 0
        %615 = vmatprep.subr.bf16.mxu0 0
        %616 = vmatpush1.bf16.msra.mxu0 0
        %617 = vmatprep.subr.bf16.mxu0 0
        %618 = vmatpush1.bf16.msra.mxu0 %v602
        %619 = vmatprep.subr.bf16.mxu0 0
        %620 = vmatpush1.bf16.msra.mxu0 %v601
        %621 = vmatprep.subr.bf16.mxu0 0
        %622 = vmatpush2.bf16.msra.mxu0 0
        %623 = vmatprep.subr.bf16.mxu0 0
        %624 = vmatpush2.bf16.msra.mxu0 0
        %625 = vmatprep.subr.bf16.mxu0 0
        %626 = vmatpush2.bf16.msra.mxu0 0
        %627 = vmatprep.subr.bf16.mxu0 0
        %628 = vmatpush2.bf16.msra.mxu0 0
        %629 = vmatprep.subr.bf16.mxu0 0
        %630 = vmatpush2.bf16.msra.mxu0 0
        %631 = vmatprep.subr.bf16.mxu0 0
        %632 = vmatpush2.bf16.msra.mxu0 0
        %633 = vmatprep.subr.bf16.mxu0 0
        %634 = vmatpush2.bf16.msra.mxu0 0
        %635 = vmatprep.subr.bf16.mxu0 0
        %636 = vmatpush2.bf16.msra.mxu0 0
        %637 = vmatprep.mubr.bf16.mxu0 0
        %638 = vmatmul.mubr.bf16.gmra.mxu0 %v374
        %v639 = vpop.f32.mrf.mxu0
        %v640 = vadd.f32 %v591, %v639
        %v641 = vpop.f32.mrf.mxu0
        %v642 = vpop.f32.mrf.mxu0
        %v643 = vadd.f32 %v591, %v642
        %v644 = vpop.f32.mrf.mxu0
        %645 = vmatprep.mubr.bf16.mxu0 0
        %646 = vmatmul.mubr.bf16.gmra.mxu0 %v377
        %v647 = vpop.f32.mrf.mxu0
        %v648 = vadd.f32 %v591, %v647
        %v649 = vpop.f32.mrf.mxu0
        %v650 = vpop.f32.mrf.mxu0
        %v651 = vadd.f32 %v591, %v650
        %v652 = vpop.f32.mrf.mxu0
        %653 = vmatprep.mubr.bf16.mxu0 0
        %654 = vmatmul.mubr.bf16.gmra.mxu0 %v380
        %v655 = vpop.f32.mrf.mxu0
        %v656 = vadd.f32 %v591, %v655
        %v657 = vpop.f32.mrf.mxu0
        %v658 = vpop.f32.mrf.mxu0
        %v659 = vadd.f32 %v591, %v658
        %v660 = vpop.f32.mrf.mxu0
        %661 = vmatprep.mubr.bf16.mxu0 0
        %662 = vmatmul.mubr.bf16.gmra.mxu0 %v383
        %v663 = vpop.f32.mrf.mxu0
        %v664 = vadd.f32 %v591, %v663
        %v665 = vpop.f32.mrf.mxu0
        %v666 = vpop.f32.mrf.mxu0
        %v667 = vadd.f32 %v591, %v666
        %v668 = vpop.f32.mrf.mxu0
        %669 = vmatprep.mubr.bf16.mxu0 0
        %670 = vmatmul.mubr.bf16.gmra.mxu0 %v386
        %v671 = vpop.f32.mrf.mxu0
        %v672 = vadd.f32 %v591, %v671
        %v673 = vpop.f32.mrf.mxu0
        %v674 = vpop.f32.mrf.mxu0
        %v675 = vadd.f32 %v591, %v674
        %v676 = vpop.f32.mrf.mxu0
        %677 = vmatprep.mubr.bf16.mxu0 0
        %678 = vmatmul.mubr.bf16.gmra.mxu0 %v389
        %v679 = vpop.f32.mrf.mxu0
        %v680 = vadd.f32 %v591, %v679
        %v681 = vpop.f32.mrf.mxu0
        %v682 = vpop.f32.mrf.mxu0
        %v683 = vadd.f32 %v591, %v682
        %v684 = vpop.f32.mrf.mxu0
        %685 = vmatprep.mubr.bf16.mxu0 0
        %686 = vmatmul.mubr.bf16.gmra.mxu0 %v392
        %v687 = vpop.f32.mrf.mxu0
        %v688 = vadd.f32 %v591, %v687
        %v689 = vpop.f32.mrf.mxu0
        %v690 = vpop.f32.mrf.mxu0
        %v691 = vadd.f32 %v591, %v690
        %v692 = vpop.f32.mrf.mxu0
        %693 = vmatprep.mubr.bf16.mxu0 0
        %694 = vmatmul.mubr.bf16.gmra.mxu0 %v395
        %v695 = vpop.f32.mrf.mxu0
        %v696 = vadd.f32 %v591, %v695
        %v697 = vpop.f32.mrf.mxu0
        %v698 = vpop.f32.mrf.mxu0
        %v699 = vadd.f32 %v591, %v698
        %v700 = vpop.f32.mrf.mxu0
        %701 = vmatprep.mubr.bf16.mxu0 0
        %702 = vmatmul.mubr.bf16.gmra.mxu0 %v398
        %v703 = vpop.f32.mrf.mxu0
        %v704 = vadd.f32 %v591, %v703
        %v705 = vpop.f32.mrf.mxu0
        %v706 = vpop.f32.mrf.mxu0
        %v707 = vadd.f32 %v591, %v706
        %v708 = vpop.f32.mrf.mxu0
        %709 = vmatprep.mubr.bf16.mxu0 0
        %710 = vmatmul.mubr.bf16.gmra.mxu0 %v401
        %v711 = vpop.f32.mrf.mxu0
        %v712 = vadd.f32 %v591, %v711
        %v713 = vpop.f32.mrf.mxu0
        %v714 = vpop.f32.mrf.mxu0
        %v715 = vadd.f32 %v591, %v714
        %v716 = vpop.f32.mrf.mxu0
        %717 = vmatprep.mubr.bf16.mxu0 0
        %718 = vmatmul.mubr.bf16.gmra.mxu0 %v404
        %v719 = vpop.f32.mrf.mxu0
        %v720 = vadd.f32 %v591, %v719
        %v721 = vpop.f32.mrf.mxu0
        %v722 = vpop.f32.mrf.mxu0
        %v723 = vadd.f32 %v591, %v722
        %v724 = vpop.f32.mrf.mxu0
        %725 = vmatprep.mubr.bf16.mxu0 0
        %726 = vmatmul.mubr.bf16.gmra.mxu0 %v407
        %v727 = vpop.f32.mrf.mxu0
        %v728 = vadd.f32 %v591, %v727
        %v729 = vpop.f32.mrf.mxu0
        %v730 = vpop.f32.mrf.mxu0
        %v731 = vadd.f32 %v591, %v730
        %v732 = vpop.f32.mrf.mxu0
        %733 = vmatprep.mubr.bf16.mxu0 0
        %734 = vmatmul.mubr.bf16.gmra.mxu0 %v410
        %v735 = vpop.f32.mrf.mxu0
        %v736 = vadd.f32 %v591, %v735
        %v737 = vpop.f32.mrf.mxu0
        %v738 = vpop.f32.mrf.mxu0
        %v739 = vadd.f32 %v591, %v738
        %v740 = vpop.f32.mrf.mxu0
        %741 = vmatprep.mubr.bf16.mxu0 0
        %742 = vmatmul.mubr.bf16.gmra.mxu0 %v413
        %v743 = vpop.f32.mrf.mxu0
        %v744 = vadd.f32 %v591, %v743
        %v745 = vpop.f32.mrf.mxu0
        %v746 = vpop.f32.mrf.mxu0
        %v747 = vadd.f32 %v591, %v746
        %v748 = vpop.f32.mrf.mxu0
        %749 = vmatprep.mubr.bf16.mxu0 0
        %750 = vmatmul.mubr.bf16.gmra.mxu0 %v416
        %v751 = vpop.f32.mrf.mxu0
        %v752 = vadd.f32 %v591, %v751
        %v753 = vpop.f32.mrf.mxu0
        %v754 = vpop.f32.mrf.mxu0
        %v755 = vadd.f32 %v591, %v754
        %v756 = vpop.f32.mrf.mxu0
        %757 = vmatprep.mubr.bf16.mxu0 0
        %758 = vmatmul.mubr.bf16.gmra.mxu0 %v419
        %v759 = vpop.f32.mrf.mxu0
        %v760 = vadd.f32 %v591, %v759
        %v761 = vpop.f32.mrf.mxu0
        %v762 = vpop.f32.mrf.mxu0
        %v763 = vadd.f32 %v591, %v762
        %v764 = vpop.f32.mrf.mxu0
        %765 = vdwg.mxu0
        %v766 = vmul.f32 %v456, 0.5
        %v767 = vmul.f32 %v459, 0.5
        %v768 = vmul.f32 %v464, 0.5
        %v769 = vmul.f32 %v467, 0.5
        %v770 = vmul.f32 %v472, 0.5
        %v771 = vmul.f32 %v475, 0.5
        %v772 = vmul.f32 %v480, 0.5
        %v773 = vmul.f32 %v483, 0.5
        %v774 = vmul.f32 %v488, 0.5
        %v775 = vmul.f32 %v491, 0.5
        %v776 = vmul.f32 %v496, 0.5
        %v777 = vmul.f32 %v499, 0.5
        %v778 = vmul.f32 %v504, 0.5
        %v779 = vmul.f32 %v507, 0.5
        %v780 = vmul.f32 %v512, 0.5
        %v781 = vmul.f32 %v515, 0.5
        %v782 = vmul.f32 %v520, 0.5
        %v783 = vmul.f32 %v523, 0.5
        %v784 = vmul.f32 %v528, 0.5
        %v785 = vmul.f32 %v531, 0.5
        %v786 = vmul.f32 %v536, 0.5
        %v787 = vmul.f32 %v539, 0.5
        %v788 = vmul.f32 %v544, 0.5
        %v789 = vmul.f32 %v547, 0.5
        %v790 = vmul.f32 %v552, 0.5
        %v791 = vmul.f32 %v555, 0.5
        %v792 = vmul.f32 %v560, 0.5
        %v793 = vmul.f32 %v563, 0.5
        %v794 = vmul.f32 %v568, 0.5
        %v795 = vmul.f32 %v571, 0.5
        %v796 = vmul.f32 %v576, 0.5
        %v797 = vmul.f32 %v579, 0.5
        %v798 = vmul.f32 %v456, 0.70710677
        %v799 = vmul.f32 %v459, 0.70710677
        %v800 = vmul.f32 %v464, 0.70710677
        %v801 = vmul.f32 %v467, 0.70710677
        %v802 = vmul.f32 %v472, 0.70710677
        %v803 = vmul.f32 %v475, 0.70710677
        %v804 = vmul.f32 %v480, 0.70710677
        %v805 = vmul.f32 %v483, 0.70710677
        %v806 = vmul.f32 %v488, 0.70710677
        %v807 = vmul.f32 %v491, 0.70710677
        %v808 = vmul.f32 %v496, 0.70710677
        %v809 = vmul.f32 %v499, 0.70710677
        %v810 = vmul.f32 %v504, 0.70710677
        %v811 = vmul.f32 %v507, 0.70710677
        %v812 = vmul.f32 %v512, 0.70710677
        %v813 = vmul.f32 %v515, 0.70710677
        %v814 = vmul.f32 %v520, 0.70710677
        %v815 = vmul.f32 %v523, 0.70710677
        %v816 = vmul.f32 %v528, 0.70710677
        %v817 = vmul.f32 %v531, 0.70710677
        %v818 = vmul.f32 %v536, 0.70710677
        %v819 = vmul.f32 %v539, 0.70710677
        %v820 = vmul.f32 %v544, 0.70710677
        %v821 = vmul.f32 %v547, 0.70710677
        %v822 = vmul.f32 %v552, 0.70710677
        %v823 = vmul.f32 %v555, 0.70710677
        %v824 = vmul.f32 %v560, 0.70710677
        %v825 = vmul.f32 %v563, 0.70710677
        %v826 = vmul.f32 %v568, 0.70710677
        %v827 = vmul.f32 %v571, 0.70710677
        %v828 = vmul.f32 %v576, 0.70710677
        %v829 = vmul.f32 %v579, 0.70710677
        %v830 = verf.f32.pop %v798
        %v831 = verf.f32.pop %v799
        %v832 = verf.f32.pop %v800
        %v833 = verf.f32.pop %v801
        %v834 = verf.f32.pop %v802
        %v835 = verf.f32.pop %v803
        %v836 = verf.f32.pop %v804
        %v837 = verf.f32.pop %v805
        %v838 = verf.f32.pop %v806
        %v839 = verf.f32.pop %v807
        %v840 = verf.f32.pop %v808
        %v841 = verf.f32.pop %v809
        %v842 = verf.f32.pop %v810
        %v843 = verf.f32.pop %v811
        %v844 = verf.f32.pop %v812
        %v845 = verf.f32.pop %v813
        %v846 = verf.f32.pop %v814
        %v847 = verf.f32.pop %v815
        %v848 = verf.f32.pop %v816
        %v849 = verf.f32.pop %v817
        %v850 = verf.f32.pop %v818
        %v851 = verf.f32.pop %v819
        %v852 = verf.f32.pop %v820
        %v853 = verf.f32.pop %v821
        %v854 = verf.f32.pop %v822
        %v855 = verf.f32.pop %v823
        %v856 = verf.f32.pop %v824
        %v857 = verf.f32.pop %v825
        %v858 = verf.f32.pop %v826
        %v859 = verf.f32.pop %v827
        %v860 = verf.f32.pop %v828
        %v861 = verf.f32.pop %v829
        %v862 = vadd.f32 %v830, 1.0
        %v863 = vadd.f32 %v831, 1.0
        %v864 = vadd.f32 %v832, 1.0
        %v865 = vadd.f32 %v833, 1.0
        %v866 = vadd.f32 %v834, 1.0
        %v867 = vadd.f32 %v835, 1.0
        %v868 = vadd.f32 %v836, 1.0
        %v869 = vadd.f32 %v837, 1.0
        %v870 = vadd.f32 %v838, 1.0
        %v871 = vadd.f32 %v839, 1.0
        %v872 = vadd.f32 %v840, 1.0
        %v873 = vadd.f32 %v841, 1.0
        %v874 = vadd.f32 %v842, 1.0
        %v875 = vadd.f32 %v843, 1.0
        %v876 = vadd.f32 %v844, 1.0
        %v877 = vadd.f32 %v845, 1.0
        %v878 = vadd.f32 %v846, 1.0
        %v879 = vadd.f32 %v847, 1.0
        %v880 = vadd.f32 %v848, 1.0
        %v881 = vadd.f32 %v849, 1.0
        %v882 = vadd.f32 %v850, 1.0
        %v883 = vadd.f32 %v851, 1.0
        %v884 = vadd.f32 %v852, 1.0
        %v885 = vadd.f32 %v853, 1.0
        %v886 = vadd.f32 %v854, 1.0
        %v887 = vadd.f32 %v855, 1.0
        %v888 = vadd.f32 %v856, 1.0
        %v889 = vadd.f32 %v857, 1.0
        %v890 = vadd.f32 %v858, 1.0
        %v891 = vadd.f32 %v859, 1.0
        %v892 = vadd.f32 %v860, 1.0
        %v893 = vadd.f32 %v861, 1.0
        %v894 = vmul.f32 %v766, %v862
        %v895 = vmul.f32 %v767, %v863
        %v896 = vmul.f32 %v768, %v864
        %v897 = vmul.f32 %v769, %v865
        %v898 = vmul.f32 %v770, %v866
        %v899 = vmul.f32 %v771, %v867
        %v900 = vmul.f32 %v772, %v868
        %v901 = vmul.f32 %v773, %v869
        %v902 = vmul.f32 %v774, %v870
        %v903 = vmul.f32 %v775, %v871
        %v904 = vmul.f32 %v776, %v872
        %v905 = vmul.f32 %v777, %v873
        %v906 = vmul.f32 %v778, %v874
        %v907 = vmul.f32 %v779, %v875
        %v908 = vmul.f32 %v780, %v876
        %v909 = vmul.f32 %v781, %v877
        %v910 = vmul.f32 %v782, %v878
        %v911 = vmul.f32 %v783, %v879
        %v912 = vmul.f32 %v784, %v880
        %v913 = vmul.f32 %v785, %v881
        %v914 = vmul.f32 %v786, %v882
        %v915 = vmul.f32 %v787, %v883
        %v916 = vmul.f32 %v788, %v884
        %v917 = vmul.f32 %v789, %v885
        %v918 = vmul.f32 %v790, %v886
        %v919 = vmul.f32 %v791, %v887
        %v920 = vmul.f32 %v792, %v888
        %v921 = vmul.f32 %v793, %v889
        %v922 = vmul.f32 %v794, %v890
        %v923 = vmul.f32 %v795, %v891
        %v924 = vmul.f32 %v796, %v892
        %v925 = vmul.f32 %v797, %v893
        %v926 = vmul.f32 %v894, %v640
        %v927 = vmul.f32 %v895, %v643
        %v928 = vmul.f32 %v896, %v648
        %v929 = vmul.f32 %v897, %v651
        %v930 = vmul.f32 %v898, %v656
        %v931 = vmul.f32 %v899, %v659
        %v932 = vmul.f32 %v900, %v664
        %v933 = vmul.f32 %v901, %v667
        %v934 = vmul.f32 %v902, %v672
        %v935 = vmul.f32 %v903, %v675
        %v936 = vmul.f32 %v904, %v680
        %v937 = vmul.f32 %v905, %v683
        %v938 = vmul.f32 %v906, %v688
        %v939 = vmul.f32 %v907, %v691
        %v940 = vmul.f32 %v908, %v696
        %v941 = vmul.f32 %v909, %v699
        %v942 = vmul.f32 %v910, %v704
        %v943 = vmul.f32 %v911, %v707
        %v944 = vmul.f32 %v912, %v712
        %v945 = vmul.f32 %v913, %v715
        %v946 = vmul.f32 %v914, %v720
        %v947 = vmul.f32 %v915, %v723
        %v948 = vmul.f32 %v916, %v728
        %v949 = vmul.f32 %v917, %v731
        %v950 = vmul.f32 %v918, %v736
        %v951 = vmul.f32 %v919, %v739
        %v952 = vmul.f32 %v920, %v744
        %v953 = vmul.f32 %v921, %v747
        %v954 = vmul.f32 %v922, %v752
        %v955 = vmul.f32 %v923, %v755
        %v956 = vmul.f32 %v924, %v760
        %v957 = vmul.f32 %v925, %v763
        %v958 = vpack.c.bf16 %v927, %v926
        %v959 = vpack.c.bf16 %v929, %v928
        %v960 = vpack.c.bf16 %v931, %v930
        %v961 = vpack.c.bf16 %v933, %v932
        %v962 = vpack.c.bf16 %v935, %v934
        %v963 = vpack.c.bf16 %v937, %v936
        %v964 = vpack.c.bf16 %v939, %v938
        %v965 = vpack.c.bf16 %v941, %v940
        %v966 = vpack.c.bf16 %v943, %v942
        %v967 = vpack.c.bf16 %v945, %v944
        %v968 = vpack.c.bf16 %v947, %v946
        %v969 = vpack.c.bf16 %v949, %v948
        %v970 = vpack.c.bf16 %v951, %v950
        %v971 = vpack.c.bf16 %v953, %v952
        %v972 = vpack.c.bf16 %v955, %v954
        %v973 = vpack.c.bf16 %v957, %v956
        %v974 = vld [vmem:[%s5] sm:$0xf]
        %v975 = vld [vmem:[%s5 + $0x4] sm:$0xf]
        %v976 = vld [vmem:[%s5 + $0x8] sm:$0xf]
        %v977 = vld [vmem:[%s5 + $0xc] sm:$0xf]
        %v978 = vld [vmem:[%s5 + $0x10] sm:$0xf]
        %v979 = vld [vmem:[%s5 + $0x14] sm:$0xf]
        %v980 = vld [vmem:[%s5 + $0x18] sm:$0xf]
        %v981 = vld [vmem:[%s5 + $0x1c] sm:$0xf]
        %v982 = vld [vmem:[%s6] sm:$0x1]
        %v984 = vlaneseq
        %v985 = vshrl.u32 %v984, 7
        %v986 = vsub.s32 0, %v985
        %v987 = vrot.slane %v982, %v986
        %v997 = vunpack.c.l.b16 %v974
        %v998 = vunpack.c.l.b16 %v975
        %v999 = vunpack.c.l.b16 %v976
        %v1000 = vunpack.c.l.b16 %v977
        %v1001 = vunpack.c.l.b16 %v978
        %v1002 = vunpack.c.l.b16 %v979
        %v1003 = vunpack.c.l.b16 %v980
        %v1004 = vunpack.c.l.b16 %v981
        %v1005 = vpack.c.b16 %v998, %v997
        %v1006 = vpack.c.b16 %v1000, %v999
        %v1007 = vpack.c.b16 %v1002, %v1001
        %v1008 = vpack.c.b16 %v1004, %v1003
        %vm1013 = vcmask 523264
        %v1015 = vsel %vm1013, %v958, 0
        %v1018 = vsel %vm1013, %v959, 0
        %v1021 = vsel %vm1013, %v960, 0
        %v1024 = vsel %vm1013, %v961, 0
        %v1027 = vsel %vm1013, %v962, 0
        %v1030 = vsel %vm1013, %v963, 0
        %v1033 = vsel %vm1013, %v964, 0
        %v1036 = vsel %vm1013, %v965, 0
        %v1039 = vsel %vm1013, %v966, 0
        %v1042 = vsel %vm1013, %v967, 0
        %v1045 = vsel %vm1013, %v968, 0
        %v1048 = vsel %vm1013, %v969, 0
        %v1051 = vsel %vm1013, %v970, 0
        %v1054 = vsel %vm1013, %v971, 0
        %v1057 = vsel %vm1013, %v972, 0
        %v1060 = vsel %vm1013, %v973, 0
        %1062 = vmatprep.subr.bf16.mxu0 0
        %1063 = vmatpush1.bf16.msra.mxu0 0
        %1064 = vmatprep.subr.bf16.mxu0 0
        %1065 = vmatpush1.bf16.msra.mxu0 0
        %1066 = vmatprep.subr.bf16.mxu0 0
        %1067 = vmatpush1.bf16.msra.mxu0 0
        %1068 = vmatprep.subr.bf16.mxu0 0
        %1069 = vmatpush1.bf16.msra.mxu0 0
        %1070 = vmatprep.subr.bf16.mxu0 0
        %1071 = vmatpush1.bf16.msra.mxu0 %v1008
        %1072 = vmatprep.subr.bf16.mxu0 0
        %1073 = vmatpush1.bf16.msra.mxu0 %v1007
        %1074 = vmatprep.subr.bf16.mxu0 0
        %1075 = vmatpush1.bf16.msra.mxu0 %v1006
        %1076 = vmatprep.subr.bf16.mxu0 0
        %1077 = vmatpush1.bf16.msra.mxu0 %v1005
        %1078 = vmatprep.subr.bf16.mxu0 0
        %1079 = vmatpush2.bf16.msra.mxu0 0
        %1080 = vmatprep.subr.bf16.mxu0 0
        %1081 = vmatpush2.bf16.msra.mxu0 0
        %1082 = vmatprep.subr.bf16.mxu0 0
        %1083 = vmatpush2.bf16.msra.mxu0 0
        %1084 = vmatprep.subr.bf16.mxu0 0
        %1085 = vmatpush2.bf16.msra.mxu0 0
        %1086 = vmatprep.subr.bf16.mxu0 0
        %1087 = vmatpush2.bf16.msra.mxu0 0
        %1088 = vmatprep.subr.bf16.mxu0 0
        %1089 = vmatpush2.bf16.msra.mxu0 0
        %1090 = vmatprep.subr.bf16.mxu0 0
        %1091 = vmatpush2.bf16.msra.mxu0 0
        %1092 = vmatprep.subr.bf16.mxu0 0
        %1093 = vmatpush2.bf16.msra.mxu0 0
        %1094 = vmatprep.mubr.bf16.mxu0 0
        %1095 = vmatmul.mubr.bf16.gmra.mxu0 %v1015
        %v1096 = vpop.f32.mrf.mxu0
        %v1097 = vadd.f32 %v987, %v1096
        %v1098 = vpop.f32.mrf.mxu0
        %v1099 = vpop.f32.mrf.mxu0
        %v1100 = vadd.f32 %v987, %v1099
        %v1101 = vpop.f32.mrf.mxu0
        %1102 = vmatprep.mubr.bf16.mxu0 0
        %1103 = vmatmul.mubr.bf16.gmra.mxu0 %v1018
        %v1104 = vpop.f32.mrf.mxu0
        %v1105 = vadd.f32 %v987, %v1104
        %v1106 = vpop.f32.mrf.mxu0
        %v1107 = vpop.f32.mrf.mxu0
        %v1108 = vadd.f32 %v987, %v1107
        %v1109 = vpop.f32.mrf.mxu0
        %1110 = vmatprep.mubr.bf16.mxu0 0
        %1111 = vmatmul.mubr.bf16.gmra.mxu0 %v1021
        %v1112 = vpop.f32.mrf.mxu0
        %v1113 = vadd.f32 %v987, %v1112
        %v1114 = vpop.f32.mrf.mxu0
        %v1115 = vpop.f32.mrf.mxu0
        %v1116 = vadd.f32 %v987, %v1115
        %v1117 = vpop.f32.mrf.mxu0
        %1118 = vmatprep.mubr.bf16.mxu0 0
        %1119 = vmatmul.mubr.bf16.gmra.mxu0 %v1024
        %v1120 = vpop.f32.mrf.mxu0
        %v1121 = vadd.f32 %v987, %v1120
        %v1122 = vpop.f32.mrf.mxu0
        %v1123 = vpop.f32.mrf.mxu0
        %v1124 = vadd.f32 %v987, %v1123
        %v1125 = vpop.f32.mrf.mxu0
        %1126 = vmatprep.mubr.bf16.mxu0 0
        %1127 = vmatmul.mubr.bf16.gmra.mxu0 %v1027
        %v1128 = vpop.f32.mrf.mxu0
        %v1129 = vadd.f32 %v987, %v1128
        %v1130 = vpop.f32.mrf.mxu0
        %v1131 = vpop.f32.mrf.mxu0
        %v1132 = vadd.f32 %v987, %v1131
        %v1133 = vpop.f32.mrf.mxu0
        %1134 = vmatprep.mubr.bf16.mxu0 0
        %1135 = vmatmul.mubr.bf16.gmra.mxu0 %v1030
        %v1136 = vpop.f32.mrf.mxu0
        %v1137 = vadd.f32 %v987, %v1136
        %v1138 = vpop.f32.mrf.mxu0
        %v1139 = vpop.f32.mrf.mxu0
        %v1140 = vadd.f32 %v987, %v1139
        %v1141 = vpop.f32.mrf.mxu0
        %1142 = vmatprep.mubr.bf16.mxu0 0
        %1143 = vmatmul.mubr.bf16.gmra.mxu0 %v1033
        %v1144 = vpop.f32.mrf.mxu0
        %v1145 = vadd.f32 %v987, %v1144
        %v1146 = vpop.f32.mrf.mxu0
        %v1147 = vpop.f32.mrf.mxu0
        %v1148 = vadd.f32 %v987, %v1147
        %v1149 = vpop.f32.mrf.mxu0
        %1150 = vmatprep.mubr.bf16.mxu0 0
        %1151 = vmatmul.mubr.bf16.gmra.mxu0 %v1036
        %v1152 = vpop.f32.mrf.mxu0
        %v1153 = vadd.f32 %v987, %v1152
        %v1154 = vpop.f32.mrf.mxu0
        %v1155 = vpop.f32.mrf.mxu0
        %v1156 = vadd.f32 %v987, %v1155
        %v1157 = vpop.f32.mrf.mxu0
        %1158 = vmatprep.mubr.bf16.mxu0 0
        %1159 = vmatmul.mubr.bf16.gmra.mxu0 %v1039
        %v1160 = vpop.f32.mrf.mxu0
        %v1161 = vadd.f32 %v987, %v1160
        %v1162 = vpop.f32.mrf.mxu0
        %v1163 = vpop.f32.mrf.mxu0
        %v1164 = vadd.f32 %v987, %v1163
        %v1165 = vpop.f32.mrf.mxu0
        %1166 = vmatprep.mubr.bf16.mxu0 0
        %1167 = vmatmul.mubr.bf16.gmra.mxu0 %v1042
        %v1168 = vpop.f32.mrf.mxu0
        %v1169 = vadd.f32 %v987, %v1168
        %v1170 = vpop.f32.mrf.mxu0
        %v1171 = vpop.f32.mrf.mxu0
        %v1172 = vadd.f32 %v987, %v1171
        %v1173 = vpop.f32.mrf.mxu0
        %1174 = vmatprep.mubr.bf16.mxu0 0
        %1175 = vmatmul.mubr.bf16.gmra.mxu0 %v1045
        %v1176 = vpop.f32.mrf.mxu0
        %v1177 = vadd.f32 %v987, %v1176
        %v1178 = vpop.f32.mrf.mxu0
        %v1179 = vpop.f32.mrf.mxu0
        %v1180 = vadd.f32 %v987, %v1179
        %v1181 = vpop.f32.mrf.mxu0
        %1182 = vmatprep.mubr.bf16.mxu0 0
        %1183 = vmatmul.mubr.bf16.gmra.mxu0 %v1048
        %v1184 = vpop.f32.mrf.mxu0
        %v1185 = vadd.f32 %v987, %v1184
        %v1186 = vpop.f32.mrf.mxu0
        %v1187 = vpop.f32.mrf.mxu0
        %v1188 = vadd.f32 %v987, %v1187
        %v1189 = vpop.f32.mrf.mxu0
        %1190 = vmatprep.mubr.bf16.mxu0 0
        %1191 = vmatmul.mubr.bf16.gmra.mxu0 %v1051
        %v1192 = vpop.f32.mrf.mxu0
        %v1193 = vadd.f32 %v987, %v1192
        %v1194 = vpop.f32.mrf.mxu0
        %v1195 = vpop.f32.mrf.mxu0
        %v1196 = vadd.f32 %v987, %v1195
        %v1197 = vpop.f32.mrf.mxu0
        %1198 = vmatprep.mubr.bf16.mxu0 0
        %1199 = vmatmul.mubr.bf16.gmra.mxu0 %v1054
        %v1200 = vpop.f32.mrf.mxu0
        %v1201 = vadd.f32 %v987, %v1200
        %v1202 = vpop.f32.mrf.mxu0
        %v1203 = vpop.f32.mrf.mxu0
        %v1204 = vadd.f32 %v987, %v1203
        %v1205 = vpop.f32.mrf.mxu0
        %1206 = vmatprep.mubr.bf16.mxu0 0
        %1207 = vmatmul.mubr.bf16.gmra.mxu0 %v1057
        %v1208 = vpop.f32.mrf.mxu0
        %v1209 = vadd.f32 %v987, %v1208
        %v1210 = vpop.f32.mrf.mxu0
        %v1211 = vpop.f32.mrf.mxu0
        %v1212 = vadd.f32 %v987, %v1211
        %v1213 = vpop.f32.mrf.mxu0
        %1214 = vmatprep.mubr.bf16.mxu0 0
        %1215 = vmatmul.mubr.bf16.gmra.mxu0 %v1060
        %v1216 = vpop.f32.mrf.mxu0
        %v1217 = vadd.f32 %v987, %v1216
        %v1218 = vpop.f32.mrf.mxu0
        %v1219 = vpop.f32.mrf.mxu0
        %v1220 = vadd.f32 %v987, %v1219
        %v1221 = vpop.f32.mrf.mxu0
        %1222 = vdwg.mxu0
        %1223 = vst.msk [vmem:[%s280] sm:$0xff] %vm372, %v1097
        %1224 = vst.msk [vmem:[%s280 + $0x8] sm:$0xff] %vm372, %v1100
        %1225 = vst.msk [vmem:[%s280 + $0x10] sm:$0xff] %vm372, %v1105
        %1226 = vst.msk [vmem:[%s280 + $0x18] sm:$0xff] %vm372, %v1108
        %1227 = vst.msk [vmem:[%s280 + $0x20] sm:$0xff] %vm372, %v1113
        %1228 = vst.msk [vmem:[%s280 + $0x28] sm:$0xff] %vm372, %v1116
        %1229 = vst.msk [vmem:[%s280 + $0x30] sm:$0xff] %vm372, %v1121
        %1230 = vst.msk [vmem:[%s280 + $0x38] sm:$0xff] %vm372, %v1124
        %1231 = vst.msk [vmem:[%s280 + $0x40] sm:$0xff] %vm372, %v1129
        %1232 = vst.msk [vmem:[%s280 + $0x48] sm:$0xff] %vm372, %v1132
        %1233 = vst.msk [vmem:[%s280 + $0x50] sm:$0xff] %vm372, %v1137
        %1234 = vst.msk [vmem:[%s280 + $0x58] sm:$0xff] %vm372, %v1140
        %1235 = vst.msk [vmem:[%s280 + $0x60] sm:$0xff] %vm372, %v1145
        %1236 = vst.msk [vmem:[%s280 + $0x68] sm:$0xff] %vm372, %v1148
        %1237 = vst.msk [vmem:[%s280 + $0x70] sm:$0xff] %vm372, %v1153
        %1238 = vst.msk [vmem:[%s280 + $0x78] sm:$0xff] %vm372, %v1156
        %1239 = vst.msk [vmem:[%s280 + $0x80] sm:$0xff] %vm372, %v1161
        %1240 = vst.msk [vmem:[%s280 + $0x88] sm:$0xff] %vm372, %v1164
        %1241 = vst.msk [vmem:[%s280 + $0x90] sm:$0xff] %vm372, %v1169
        %1242 = vst.msk [vmem:[%s280 + $0x98] sm:$0xff] %vm372, %v1172
        %1243 = vst.msk [vmem:[%s280 + $0xa0] sm:$0xff] %vm372, %v1177
        %1244 = vst.msk [vmem:[%s280 + $0xa8] sm:$0xff] %vm372, %v1180
        %1245 = vst.msk [vmem:[%s280 + $0xb0] sm:$0xff] %vm372, %v1185
        %1246 = vst.msk [vmem:[%s280 + $0xb8] sm:$0xff] %vm372, %v1188
        %1247 = vst.msk [vmem:[%s280 + $0xc0] sm:$0xff] %vm372, %v1193
        %1248 = vst.msk [vmem:[%s280 + $0xc8] sm:$0xff] %vm372, %v1196
        %1249 = vst.msk [vmem:[%s280 + $0xd0] sm:$0xff] %vm372, %v1201
        %1250 = vst.msk [vmem:[%s280 + $0xd8] sm:$0xff] %vm372, %v1204
        %1251 = vst.msk [vmem:[%s280 + $0xe0] sm:$0xff] %vm372, %v1209
        %1252 = vst.msk [vmem:[%s280 + $0xe8] sm:$0xff] %vm372, %v1212
        %1253 = vst.msk [vmem:[%s280 + $0xf0] sm:$0xff] %vm372, %v1217
        %1254 = vst.msk [vmem:[%s280 + $0xf8] sm:$0xff] %vm372, %v1220
        %s1255 = sand.u32 %s178, 1
        %s1256 = sand.u32 %s178, 1
        %s1257 = smul.addr %s1256, 256
        %s1258 = scalar_lea.vmem [#allocation2], %s1257
        // Predicated region
        $region49: #{tpu_custom_call.1} parent=47 // pred_check
          %p1259 = pneg %p188
        $region50: #{tpu_custom_call.1} parent=47 // pred_check_branch
          %1261 = sbr.rel (%p1259) target = $region52
        $region51: #{tpu_custom_call.1} parent=47 // pred_region
          %s1262 = smul.u32 32, %s18
          %s1263 = ssub.s32 48, %s1262
          %p1264 = scmp.lt.s32.totalorder %s1263, 32
          %s1265 = scalar_select %p1264, %s1263, 32
          %s1266 = smul.u32 128, %s1265
          %p1267 = scmp.ne.s32.totalorder 0, %s1266
          %s1268 = smul.addr %s1262, 8
          %s1269 = scalar_lea.vmem %s7, %s1268
          // Predicated region
          $region53: #{tpu_custom_call.1} parent=51 // pred_check
            %p1270 = pneg %p1267
          $region54: #{tpu_custom_call.1} parent=51 // pred_check_branch
            %1272 = sbr.rel (%p1270) target = $region56
          $region55: #{tpu_custom_call.1} parent=51 // pred_region
            // Predicated region
            $region57: #{tpu_custom_call.1} parent=55 // pred_check
              _
            $region58: #{tpu_custom_call.1} parent=55 // pred_check_branch
              %1274 = sbr.rel (0) target = $region60
            $region59: #{tpu_custom_call.1} parent=55 // pred_region
              // Predicated region
              $region79: #{tpu_custom_call.1} parent=59 // pred_check
                _
              $region80: #{tpu_custom_call.1} parent=59 // pred_check_branch
                %1386 = sbr.rel (0) target = $region82
              $region81: #{tpu_custom_call.1} parent=59 // pred_region
                %s1387 = sshrl.u32 %s1265, 5
                // While loop
                $region83: #{tpu_custom_call.1} parent=81 // loop_pre_header
                  _
                $region84: #{tpu_custom_call.1} parent=81 // loop_header
                  %s1389 = sphi 0, %s1391
                  %p1390 = scmp.ge.s32.totalorder %s1389, %s1387
                  %s1394 = sphi 0, %s1463
                  %s1395 = sphi %s1258, %s1466
                  %s1396 = sphi %s1269, %s1467
                $region85: #{tpu_custom_call.1} parent=81 // loop_header_branch
                  %1393 = sbr.rel (%p1390) target = $region89
                $region86: #{tpu_custom_call.1} parent=81 // loop_body
                  %v1397 = vld [vmem:[%s1395] sm:$0xff]
                  %1398 = vst [vmem:[%s1396] sm:$0xff] %v1397
                  %v1399 = vld [vmem:[%s1395 + $0x8] sm:$0xff]
                  %1400 = vst [vmem:[%s1396 + $0x8] sm:$0xff] %v1399
                  %v1401 = vld [vmem:[%s1395 + $0x10] sm:$0xff]
                  %1402 = vst [vmem:[%s1396 + $0x10] sm:$0xff] %v1401
                  %v1403 = vld [vmem:[%s1395 + $0x18] sm:$0xff]
                  %1404 = vst [vmem:[%s1396 + $0x18] sm:$0xff] %v1403
                  %v1405 = vld [vmem:[%s1395 + $0x20] sm:$0xff]
                  %1406 = vst [vmem:[%s1396 + $0x20] sm:$0xff] %v1405
                  %v1407 = vld [vmem:[%s1395 + $0x28] sm:$0xff]
                  %1408 = vst [vmem:[%s1396 + $0x28] sm:$0xff] %v1407
                  %v1409 = vld [vmem:[%s1395 + $0x30] sm:$0xff]
                  %1410 = vst [vmem:[%s1396 + $0x30] sm:$0xff] %v1409
                  %v1411 = vld [vmem:[%s1395 + $0x38] sm:$0xff]
                  %1412 = vst [vmem:[%s1396 + $0x38] sm:$0xff] %v1411
                  %v1413 = vld [vmem:[%s1395 + $0x40] sm:$0xff]
                  %1414 = vst [vmem:[%s1396 + $0x40] sm:$0xff] %v1413
                  %v1415 = vld [vmem:[%s1395 + $0x48] sm:$0xff]
                  %1416 = vst [vmem:[%s1396 + $0x48] sm:$0xff] %v1415
                  %v1417 = vld [vmem:[%s1395 + $0x50] sm:$0xff]
                  %1418 = vst [vmem:[%s1396 + $0x50] sm:$0xff] %v1417
                  %v1419 = vld [vmem:[%s1395 + $0x58] sm:$0xff]
                  %1420 = vst [vmem:[%s1396 + $0x58] sm:$0xff] %v1419
                  %v1421 = vld [vmem:[%s1395 + $0x60] sm:$0xff]
                  %1422 = vst [vmem:[%s1396 + $0x60] sm:$0xff] %v1421
                  %v1423 = vld [vmem:[%s1395 + $0x68] sm:$0xff]
                  %1424 = vst [vmem:[%s1396 + $0x68] sm:$0xff] %v1423
                  %v1425 = vld [vmem:[%s1395 + $0x70] sm:$0xff]
                  %1426 = vst [vmem:[%s1396 + $0x70] sm:$0xff] %v1425
                  %v1427 = vld [vmem:[%s1395 + $0x78] sm:$0xff]
                  %1428 = vst [vmem:[%s1396 + $0x78] sm:$0xff] %v1427
                  %v1429 = vld [vmem:[%s1395 + $0x80] sm:$0xff]
                  %1430 = vst [vmem:[%s1396 + $0x80] sm:$0xff] %v1429
                  %v1431 = vld [vmem:[%s1395 + $0x88] sm:$0xff]
                  %1432 = vst [vmem:[%s1396 + $0x88] sm:$0xff] %v1431
                  %v1433 = vld [vmem:[%s1395 + $0x90] sm:$0xff]
                  %1434 = vst [vmem:[%s1396 + $0x90] sm:$0xff] %v1433
                  %v1435 = vld [vmem:[%s1395 + $0x98] sm:$0xff]
                  %1436 = vst [vmem:[%s1396 + $0x98] sm:$0xff] %v1435
                  %v1437 = vld [vmem:[%s1395 + $0xa0] sm:$0xff]
                  %1438 = vst [vmem:[%s1396 + $0xa0] sm:$0xff] %v1437
                  %v1439 = vld [vmem:[%s1395 + $0xa8] sm:$0xff]
                  %1440 = vst [vmem:[%s1396 + $0xa8] sm:$0xff] %v1439
                  %v1441 = vld [vmem:[%s1395 + $0xb0] sm:$0xff]
                  %1442 = vst [vmem:[%s1396 + $0xb0] sm:$0xff] %v1441
                  %v1443 = vld [vmem:[%s1395 + $0xb8] sm:$0xff]
                  %1444 = vst [vmem:[%s1396 + $0xb8] sm:$0xff] %v1443
                  %v1445 = vld [vmem:[%s1395 + $0xc0] sm:$0xff]
                  %1446 = vst [vmem:[%s1396 + $0xc0] sm:$0xff] %v1445
                  %v1447 = vld [vmem:[%s1395 + $0xc8] sm:$0xff]
                  %1448 = vst [vmem:[%s1396 + $0xc8] sm:$0xff] %v1447
                  %v1449 = vld [vmem:[%s1395 + $0xd0] sm:$0xff]
                  %1450 = vst [vmem:[%s1396 + $0xd0] sm:$0xff] %v1449
                  %v1451 = vld [vmem:[%s1395 + $0xd8] sm:$0xff]
                  %1452 = vst [vmem:[%s1396 + $0xd8] sm:$0xff] %v1451
                  %v1453 = vld [vmem:[%s1395 + $0xe0] sm:$0xff]
                  %1454 = vst [vmem:[%s1396 + $0xe0] sm:$0xff] %v1453
                  %v1455 = vld [vmem:[%s1395 + $0xe8] sm:$0xff]
                  %1456 = vst [vmem:[%s1396 + $0xe8] sm:$0xff] %v1455
                  %v1457 = vld [vmem:[%s1395 + $0xf0] sm:$0xff]
                  %1458 = vst [vmem:[%s1396 + $0xf0] sm:$0xff] %v1457
                  %v1459 = vld [vmem:[%s1395 + $0xf8] sm:$0xff]
                  %1460 = vst [vmem:[%s1396 + $0xf8] sm:$0xff] %v1459
                  %s1461 = sadd.s32 1, %s1394
                  %p1462 = scmp.ge.s32.totalorder %s1461, %s1387
                  %s1463 = scalar_select %p1462, 0, %s1461
                  %s1464 = smul.u32 %s1463, 256
                  %s1465 = smul.u32 %s1463, 256
                  %s1466 = scalar_lea.vmem %s1258, %s1464 [#allocation2]
                  %s1467 = scalar_lea.vmem %s1269, %s1465
                $region87: #{tpu_custom_call.1} parent=81 // loop_footer
                  %s1391 = sadd.s32 %s1389, 1
                $region88: #{tpu_custom_call.1} parent=81 // loop_footer_branch
                  %1388 = sbr.rel target = $region84
                $region89: #{tpu_custom_call.1} parent=81 // loop_exit
                  _
                %s1468 = sshrl.u32 %s1265, 5
                %s1469 = sand.u32 %s1265, 31
                %s1470 = smul.u32 %s1468, 32
                %s1471 = smul.u32 8, %s1470
                %s1472 = scalar_lea.vmem %s1258, %s1471 [#allocation2]
                %s1473 = smul.u32 8, %s1470
                %s1474 = scalar_lea.vmem %s1269, %s1473
                // While loop
                $region90: #{tpu_custom_call.1} parent=81 // loop_pre_header
                  _
                $region91: #{tpu_custom_call.1} parent=81 // loop_header
                  %s1476 = sphi 0, %s1478
                  %p1477 = scmp.ge.s32.totalorder %s1476, %s1469
                  %s1481 = sphi 0, %s1488
                  %s1482 = sphi %s1472, %s1491
                  %s1483 = sphi %s1474, %s1492
                $region92: #{tpu_custom_call.1} parent=81 // loop_header_branch
                  %1480 = sbr.rel (%p1477) target = $region96
                $region93: #{tpu_custom_call.1} parent=81 // loop_body
                  %v1484 = vld [vmem:[%s1482] sm:$0xff]
                  %1485 = vst [vmem:[%s1483] sm:$0xff] %v1484
                  %s1486 = sadd.s32 1, %s1481
                  %p1487 = scmp.ge.s32.totalorder %s1486, %s1469
                  %s1488 = scalar_select %p1487, 0, %s1486
                  %s1489 = smul.u32 %s1488, 8
                  %s1490 = smul.u32 %s1488, 8
                  %s1491 = scalar_lea.vmem %s1472, %s1489 [#allocation2]
                  %s1492 = scalar_lea.vmem %s1474, %s1490
                $region94: #{tpu_custom_call.1} parent=81 // loop_footer
                  %s1478 = sadd.s32 %s1476, 1
                $region95: #{tpu_custom_call.1} parent=81 // loop_footer_branch
                  %1475 = sbr.rel target = $region91
                $region96: #{tpu_custom_call.1} parent=81 // loop_exit
                  _
              $region82: #{tpu_custom_call.1} parent=59 // pred_fallthru
                _
              // Predicated region
              $region97: #{tpu_custom_call.1} parent=59 // pred_check
                _
              $region98: #{tpu_custom_call.1} parent=59 // pred_check_branch
                %1494 = sbr.rel target = $region100
              $region99: #{tpu_custom_call.1} parent=59 // pred_region
                _
              $region100: #{tpu_custom_call.1} parent=59 // pred_fallthru
                _
            $region60: #{tpu_custom_call.1} parent=55 // pred_fallthru
              _
            // Predicated region
            $region61: #{tpu_custom_call.1} parent=55 // pred_check
              _
            $region62: #{tpu_custom_call.1} parent=55 // pred_check_branch
              %1276 = sbr.rel target = $region64
            $region63: #{tpu_custom_call.1} parent=55 // pred_region
              %s1278 = ssub.s32 256, 1
              %s1279 = sshrl.u32 %s1265, 5
              // While loop
              $region65: #{tpu_custom_call.1} parent=63 // loop_pre_header
                _
              $region66: #{tpu_custom_call.1} parent=63 // loop_header
                %s1281 = sphi 0, %s1283
                %p1282 = scmp.ge.s32.totalorder %s1281, %s1279
                %s1286 = sphi 0, %s1355
                %s1287 = sphi %s1258, %s1358
                %s1288 = sphi %s1269, %s1359
              $region67: #{tpu_custom_call.1} parent=63 // loop_header_branch
                %1285 = sbr.rel (%p1282) target = $region71
              $region68: #{tpu_custom_call.1} parent=63 // loop_body
                %v1289 = vld [vmem:[%s1287] sm:%s1278]
                %1290 = vst [vmem:[%s1288] sm:%s1278] %v1289
                %v1291 = vld [vmem:[%s1287 + $0x8] sm:%s1278]
                %1292 = vst [vmem:[%s1288 + $0x8] sm:%s1278] %v1291
                %v1293 = vld [vmem:[%s1287 + $0x10] sm:%s1278]
                %1294 = vst [vmem:[%s1288 + $0x10] sm:%s1278] %v1293
                %v1295 = vld [vmem:[%s1287 + $0x18] sm:%s1278]
                %1296 = vst [vmem:[%s1288 + $0x18] sm:%s1278] %v1295
                %v1297 = vld [vmem:[%s1287 + $0x20] sm:%s1278]
                %1298 = vst [vmem:[%s1288 + $0x20] sm:%s1278] %v1297
                %v1299 = vld [vmem:[%s1287 + $0x28] sm:%s1278]
                %1300 = vst [vmem:[%s1288 + $0x28] sm:%s1278] %v1299
                %v1301 = vld [vmem:[%s1287 + $0x30] sm:%s1278]
                %1302 = vst [vmem:[%s1288 + $0x30] sm:%s1278] %v1301
                %v1303 = vld [vmem:[%s1287 + $0x38] sm:%s1278]
                %1304 = vst [vmem:[%s1288 + $0x38] sm:%s1278] %v1303
                %v1305 = vld [vmem:[%s1287 + $0x40] sm:%s1278]
                %1306 = vst [vmem:[%s1288 + $0x40] sm:%s1278] %v1305
                %v1307 = vld [vmem:[%s1287 + $0x48] sm:%s1278]
                %1308 = vst [vmem:[%s1288 + $0x48] sm:%s1278] %v1307
                %v1309 = vld [vmem:[%s1287 + $0x50] sm:%s1278]
                %1310 = vst [vmem:[%s1288 + $0x50] sm:%s1278] %v1309
                %v1311 = vld [vmem:[%s1287 + $0x58] sm:%s1278]
                %1312 = vst [vmem:[%s1288 + $0x58] sm:%s1278] %v1311
                %v1313 = vld [vmem:[%s1287 + $0x60] sm:%s1278]
                %1314 = vst [vmem:[%s1288 + $0x60] sm:%s1278] %v1313
                %v1315 = vld [vmem:[%s1287 + $0x68] sm:%s1278]
                %1316 = vst [vmem:[%s1288 + $0x68] sm:%s1278] %v1315
                %v1317 = vld [vmem:[%s1287 + $0x70] sm:%s1278]
                %1318 = vst [vmem:[%s1288 + $0x70] sm:%s1278] %v1317
                %v1319 = vld [vmem:[%s1287 + $0x78] sm:%s1278]
                %1320 = vst [vmem:[%s1288 + $0x78] sm:%s1278] %v1319
                %v1321 = vld [vmem:[%s1287 + $0x80] sm:%s1278]
                %1322 = vst [vmem:[%s1288 + $0x80] sm:%s1278] %v1321
                %v1323 = vld [vmem:[%s1287 + $0x88] sm:%s1278]
                %1324 = vst [vmem:[%s1288 + $0x88] sm:%s1278] %v1323
                %v1325 = vld [vmem:[%s1287 + $0x90] sm:%s1278]
                %1326 = vst [vmem:[%s1288 + $0x90] sm:%s1278] %v1325
                %v1327 = vld [vmem:[%s1287 + $0x98] sm:%s1278]
                %1328 = vst [vmem:[%s1288 + $0x98] sm:%s1278] %v1327
                %v1329 = vld [vmem:[%s1287 + $0xa0] sm:%s1278]
                %1330 = vst [vmem:[%s1288 + $0xa0] sm:%s1278] %v1329
                %v1331 = vld [vmem:[%s1287 + $0xa8] sm:%s1278]
                %1332 = vst [vmem:[%s1288 + $0xa8] sm:%s1278] %v1331
                %v1333 = vld [vmem:[%s1287 + $0xb0] sm:%s1278]
                %1334 = vst [vmem:[%s1288 + $0xb0] sm:%s1278] %v1333
                %v1335 = vld [vmem:[%s1287 + $0xb8] sm:%s1278]
                %1336 = vst [vmem:[%s1288 + $0xb8] sm:%s1278] %v1335
                %v1337 = vld [vmem:[%s1287 + $0xc0] sm:%s1278]
                %1338 = vst [vmem:[%s1288 + $0xc0] sm:%s1278] %v1337
                %v1339 = vld [vmem:[%s1287 + $0xc8] sm:%s1278]
                %1340 = vst [vmem:[%s1288 + $0xc8] sm:%s1278] %v1339
                %v1341 = vld [vmem:[%s1287 + $0xd0] sm:%s1278]
                %1342 = vst [vmem:[%s1288 + $0xd0] sm:%s1278] %v1341
                %v1343 = vld [vmem:[%s1287 + $0xd8] sm:%s1278]
                %1344 = vst [vmem:[%s1288 + $0xd8] sm:%s1278] %v1343
                %v1345 = vld [vmem:[%s1287 + $0xe0] sm:%s1278]
                %1346 = vst [vmem:[%s1288 + $0xe0] sm:%s1278] %v1345
                %v1347 = vld [vmem:[%s1287 + $0xe8] sm:%s1278]
                %1348 = vst [vmem:[%s1288 + $0xe8] sm:%s1278] %v1347
                %v1349 = vld [vmem:[%s1287 + $0xf0] sm:%s1278]
                %1350 = vst [vmem:[%s1288 + $0xf0] sm:%s1278] %v1349
                %v1351 = vld [vmem:[%s1287 + $0xf8] sm:%s1278]
                %1352 = vst [vmem:[%s1288 + $0xf8] sm:%s1278] %v1351
                %s1353 = sadd.s32 1, %s1286
                %p1354 = scmp.ge.s32.totalorder %s1353, %s1279
                %s1355 = scalar_select %p1354, 0, %s1353
                %s1356 = smul.u32 %s1355, 256
                %s1357 = smul.u32 %s1355, 256
                %s1358 = scalar_lea.vmem %s1258, %s1356 [#allocation2]
                %s1359 = scalar_lea.vmem %s1269, %s1357
              $region69: #{tpu_custom_call.1} parent=63 // loop_footer
                %s1283 = sadd.s32 %s1281, 1
              $region70: #{tpu_custom_call.1} parent=63 // loop_footer_branch
                %1280 = sbr.rel target = $region66
              $region71: #{tpu_custom_call.1} parent=63 // loop_exit
                _
              %s1360 = sshrl.u32 %s1265, 5
              %s1361 = sand.u32 %s1265, 31
              %s1362 = smul.u32 %s1360, 32
              %s1363 = smul.u32 8, %s1362
              %s1364 = scalar_lea.vmem %s1258, %s1363 [#allocation2]
              %s1365 = smul.u32 8, %s1362
              %s1366 = scalar_lea.vmem %s1269, %s1365
              // While loop
              $region72: #{tpu_custom_call.1} parent=63 // loop_pre_header
                _
              $region73: #{tpu_custom_call.1} parent=63 // loop_header
                %s1368 = sphi 0, %s1370
                %p1369 = scmp.ge.s32.totalorder %s1368, %s1361
                %s1373 = sphi 0, %s1380
                %s1374 = sphi %s1364, %s1383
                %s1375 = sphi %s1366, %s1384
              $region74: #{tpu_custom_call.1} parent=63 // loop_header_branch
                %1372 = sbr.rel (%p1369) target = $region78
              $region75: #{tpu_custom_call.1} parent=63 // loop_body
                %v1376 = vld [vmem:[%s1374] sm:%s1278]
                %1377 = vst [vmem:[%s1375] sm:%s1278] %v1376
                %s1378 = sadd.s32 1, %s1373
                %p1379 = scmp.ge.s32.totalorder %s1378, %s1361
                %s1380 = scalar_select %p1379, 0, %s1378
                %s1381 = smul.u32 %s1380, 8
                %s1382 = smul.u32 %s1380, 8
                %s1383 = scalar_lea.vmem %s1364, %s1381 [#allocation2]
                %s1384 = scalar_lea.vmem %s1366, %s1382
              $region76: #{tpu_custom_call.1} parent=63 // loop_footer
                %s1370 = sadd.s32 %s1368, 1
              $region77: #{tpu_custom_call.1} parent=63 // loop_footer_branch
                %1367 = sbr.rel target = $region73
              $region78: #{tpu_custom_call.1} parent=63 // loop_exit
                _
            $region64: #{tpu_custom_call.1} parent=55 // pred_fallthru
              _
          $region56: #{tpu_custom_call.1} parent=51 // pred_fallthru
            _
          %1495 = vnop
        $region52: #{tpu_custom_call.1} parent=47 // pred_fallthru
          _
      $region48: #{tpu_custom_call.1} parent=5 // pred_fallthru
        _
      %p1496 = scmp.le.s32.totalorder 2, %s13
      // Predicated region
      $region101: #{tpu_custom_call.1} parent=5 // pred_check
        %p1497 = pneg %p1496
      $region102: #{tpu_custom_call.1} parent=5 // pred_check_branch
        %1499 = sbr.rel (%p1497) target = $region104
      $region103: #{tpu_custom_call.1} parent=5 // pred_region
        %s1500 = ssub.s32 %s13, 2
        // Predicated region
        $region105: #{tpu_custom_call.1} parent=103 // pred_check
          %p1501 = pneg %p194
        $region106: #{tpu_custom_call.1} parent=103 // pred_check_branch
          %1503 = sbr.rel (%p1501) target = $region108
        $region107: #{tpu_custom_call.1} parent=103 // pred_region
          %s1504 = sand.u32 %s179, 1
          %s1505 = sand.u32 %s179, 1
          %s1506 = smul.addr %s1505, 256
          %s1507 = scalar_lea.vmem [#allocation2], %s1506
        $region108: #{tpu_custom_call.1} parent=103 // pred_fallthru
          _
      $region104: #{tpu_custom_call.1} parent=5 // pred_fallthru
        _
    $region6: #{tpu_custom_call.1} parent=1 // loop_footer
      %s17 = sadd.s32 1, %s13
    $region7: #{tpu_custom_call.1} parent=1 // loop_footer_branch
      %12 = sbr.rel target = $region3
    $region8: #{tpu_custom_call.1} parent=1 // loop_exit
      _

</llo_original>
